<compile_context>
chip_gen: v7x
topology: tpu7x:2x2x1
jax: 0.10.0
libtpu: 0.0.40
codegen_flags: <defaults>
</compile_context>

<pallas_src>
import functools
import math

import jax
import jax.numpy as jnp
from jax.experimental import pallas as pl
from jax.experimental.pallas import tpu as pltpu

EPS = 1e-08
FULL = False
REDUCTION = "mean"

_TARGET_TILE_BYTES = 4 * 1024 * 1024   # per-input-tile DMA target (>> 0.35 us step overhead)
_MAX_TILE_ROWS = 32768                 # compile-size guard for tiny feature dims
_KERNEL_TEMPS = 6                      # estimated live f32 full-tile temporaries in the kernel


def _round_up(x, m):
    return ((x + m - 1) // m) * m


def _sublane_align(itemsizes):
    # Native sublane packing: 8 rows for 4-byte, 16 for 2-byte, 32 for 1-byte dtypes.
    return {4: 8, 2: 16, 1: 32}.get(min(itemsizes), 8)


def _vmem_limit_bytes():
    """Generation-aware VMEM limit (~96 MiB on v5e/v6e, ~48 MiB on v7x, 48 MiB fallback)."""
    cap = 64 * 1024 * 1024
    try:
        info = pltpu.get_tpu_info()
        cap = int(getattr(info, "vmem_capacity_bytes", cap) or cap)
    except Exception:
        pass
    return min((cap * 3) // 4, 100 * 1024 * 1024)


def _choose_tile_rows(n_rows, n_cols, var_cols, itemsizes, budget, per_core_cap,
                      out_row_bytes, max_tile_rows=None):
    """Largest aligned row tile whose double-buffered tiles + f32 temps fit the budget."""
    inp_it, tgt_it, var_it = itemsizes
    align = _sublane_align(itemsizes)
    per_row = (n_cols * 2 * (inp_it + tgt_it)     # double-buffered input/target tiles
               + var_cols * 2 * var_it            # double-buffered var tile
               + n_cols * 4 * _KERNEL_TEMPS       # in-kernel f32 elementwise temporaries
               + out_row_bytes)                   # accumulator / output rows
    vmem_rows = budget // max(per_row, 1)
    target_rows = _TARGET_TILE_BYTES // max(n_cols * max(inp_it, tgt_it), 1)
    cap = _MAX_TILE_ROWS if max_tile_rows is None else max_tile_rows
    tile = max(align, min(vmem_rows, target_rows, cap, per_core_cap))
    if tile >= n_rows:
        return n_rows                             # single full block (always layout-legal)
    return max(align, (tile // align) * align)    # sublane-aligned partial tiling


def _nll_reduce_kernel(inp_ref, tgt_ref, var_ref, out_ref, acc_ref, *,
                       eps, n_rows, tile_rows, inner_tiles):
    """'mean'/'sum': per-core accumulation of row partial sums across the inner grid axis."""
    c = pl.program_id(0)           # core split (parallel)
    i = pl.program_id(1)           # accumulation step (arbitrary)

    @pl.when(i == 0)
    def _init():
        acc_ref[...] = jnp.zeros_like(acc_ref)

    inp = inp_ref[...].astype(jnp.float32)
    tgt = tgt_ref[...].astype(jnp.float32)
    var = var_ref[...].astype(jnp.float32) + eps     # (tile, D) or (tile, 1) lane-broadcast

    diff = inp - tgt
    # log / reciprocal run on the EUP; a (tile, 1) var is lane-broadcast here instead of
    # being materialised as an (N, D) array in HBM.
    terms = jnp.log(var) + (diff * diff) * pl.reciprocal(var, approx=False)

    # Per-row partial sum (lane-axis reduce); the XLU has large slack in this HBM-bound
    # kernel, and the accumulator shrinks from (tile, D) to (tile, 1).
    partial = jnp.sum(terms, axis=1, keepdims=True)

    # Mask rows whose *logical* index lies past the real batch: the padded last block and
    # any fully-clamped block on the shorter core.  Keep this as a select — padded rows
    # may contain garbage that evaluates to NaN/Inf.
    block = c * inner_tiles + i
    row = block * tile_rows + jax.lax.broadcasted_iota(jnp.int32, partial.shape, 0)
    partial = jnp.where(row < n_rows, partial, 0.0)

    acc_ref[...] += partial

    @pl.when(i == pl.num_programs(1) - 1)
    def _finalize():
        out_ref[...] = jnp.broadcast_to(jnp.sum(acc_ref[...]), out_ref.shape)


def _nll_none_kernel(inp_ref, tgt_ref, var_ref, out_ref, *, eps, full, n_cols):
    """'none': per-sample loss; each grid step handles an independent row tile."""
    inp = inp_ref[...].astype(jnp.float32)
    tgt = tgt_ref[...].astype(jnp.float32)
    var = var_ref[...].astype(jnp.float32) + eps

    diff = inp - tgt
    terms = jnp.log(var) + (diff * diff) * pl.reciprocal(var, approx=False)
    loss = 0.5 * jnp.sum(terms, axis=1, keepdims=True)   # (tile_rows, 1)
    if full:
        loss = loss + 0.5 * n_cols * math.log(2.0 * math.pi)
    # Rows of the padded last tile past the real batch are discarded by the
    # bounds-clipped output writeback.
    out_ref[...] = loss


def gaussian_nll_loss(inp, tgt, var, *, eps=EPS, full=FULL, reduction=REDUCTION,
                      max_tile_rows=None):
    if inp.shape != tgt.shape:
        raise ValueError("input and target must have same shape!")
    if var.shape[0] != inp.shape[0]:
        raise ValueError("dim 0 of var and input do not match!")
    if var.shape != inp.shape and len(var.shape) > 1 and (var.shape[1] != 1):
        raise ValueError("var is of incorrect shape!")

    n_rows, n_cols = inp.shape
    # Per-sample variance stays (N, 1) in HBM; broadcast happens inside the kernel.
    if var.shape != inp.shape:
        var = var.reshape(n_rows, 1)
    var_cols = var.shape[1]

    reduce_out = reduction in ("mean", "sum")
    itemsizes = (inp.dtype.itemsize, tgt.dtype.itemsize, var.dtype.itemsize)
    align = _sublane_align(itemsizes)

    vmem_limit = _vmem_limit_bytes()
    tile_budget = int(vmem_limit * 0.7)        # headroom for compiler-internal scratch

    out_hbm_bytes = n_rows * 4
    cost = pl.CostEstimate(
        flops=6 * n_rows * n_cols,
        transcendentals=2 * n_rows * n_cols,
        bytes_accessed=int(inp.size * inp.dtype.itemsize
                           + tgt.size * tgt.dtype.itemsize
                           + var.size * var.dtype.itemsize
                           + out_hbm_bytes),
    )

    if reduce_out:
        # Leading size-2 'parallel' axis shards the batch across v7x's two TensorCores
        # (a cheap 2-iteration outer loop on single-core v5e/v6e); the inner axis
        # accumulates into a per-core (tile_rows, 1) scratch.
        split = 2 if n_rows >= 2 * align else 1
        per_core_cap = _round_up(pl.cdiv(n_rows, split), align) if split > 1 else n_rows
        tile_rows = _choose_tile_rows(n_rows, n_cols, var_cols, itemsizes, tile_budget,
                                      per_core_cap, out_row_bytes=4,
                                      max_tile_rows=max_tile_rows)
        total_blocks = pl.cdiv(n_rows, tile_rows)
        inner = pl.cdiv(total_blocks, split)
        grid = (split, inner)

        def row_block(c, i):
            # Clamp blocks the shorter core doesn't own to the last real block; their
            # contribution is zeroed by the in-kernel logical-row mask.
            return (jnp.minimum(c * inner + i, total_blocks - 1), 0)

        in_specs = [
            pl.BlockSpec((tile_rows, n_cols), row_block),
            pl.BlockSpec((tile_rows, n_cols), row_block),
            pl.BlockSpec((tile_rows, var_cols), row_block),
        ]

        kernel = functools.partial(
            _nll_reduce_kernel, eps=eps, n_rows=n_rows,
            tile_rows=tile_rows, inner_tiles=inner)

        out = pl.pallas_call(
            kernel,
            out_shape=jax.ShapeDtypeStruct((split * 8, 128), jnp.float32),
            grid_spec=pltpu.PrefetchScalarGridSpec(
                num_scalar_prefetch=0,
                grid=grid,
                in_specs=in_specs,
                out_specs=pl.BlockSpec((8, 128), lambda c, i: (c, 0)),
                scratch_shapes=[pltpu.VMEM((tile_rows, 1), jnp.float32)],
            ),
            compiler_params=pltpu.CompilerParams(
                dimension_semantics=("parallel", "arbitrary"),
                vmem_limit_bytes=vmem_limit),
            cost_estimate=cost,
        )(inp, tgt, var)

        partials = out.reshape(split, 8, 128)[:, 0, 0]   # per-core sum of terms
        total = 0.5 * jnp.sum(partials)
        const = 0.5 * n_cols * math.log(2.0 * math.pi) if full else 0.0
        if reduction == "mean":
            return total / n_rows + const
        return total + n_rows * const

    # reduction == 'none': independent row tiles, per-sample losses; the single
    # 'parallel' grid axis shards across cores on megacore parts automatically.
    tile_rows = _choose_tile_rows(n_rows, n_cols, var_cols, itemsizes, tile_budget,
                                  per_core_cap=n_rows, out_row_bytes=8,
                                  max_tile_rows=max_tile_rows)
    grid = (pl.cdiv(n_rows, tile_rows),)

    in_specs = [
        pl.BlockSpec((tile_rows, n_cols), lambda i: (i, 0)),
        pl.BlockSpec((tile_rows, n_cols), lambda i: (i, 0)),
        pl.BlockSpec((tile_rows, var_cols), lambda i: (i, 0)),
    ]

    kernel = functools.partial(_nll_none_kernel, eps=eps, full=full, n_cols=n_cols)
    out = pl.pallas_call(
        kernel,
        out_shape=jax.ShapeDtypeStruct((n_rows, 1), jnp.float32),
        grid_spec=pltpu.PrefetchScalarGridSpec(
            num_scalar_prefetch=0,
            grid=grid,
            in_specs=in_specs,
            out_specs=pl.BlockSpec((tile_rows, 1), lambda i: (i, 0)),
        ),
        compiler_params=pltpu.CompilerParams(
            dimension_semantics=("parallel",),
            vmem_limit_bytes=vmem_limit),
        cost_estimate=cost,
    )(inp, tgt, var)
    return out[:, 0]


def _reference(inp, tgt, var, *, eps=EPS, full=FULL, reduction=REDUCTION):
    var = var + eps
    loss = 0.5 * jnp.sum(jnp.log(var) + (inp - tgt) ** 2 / var, axis=1)
    if full:
        loss = loss + 0.5 * inp.shape[1] * math.log(2.0 * math.pi)
    if reduction == "mean":
        return jnp.mean(loss)
    if reduction == "sum":
        return jnp.sum(loss)
    return loss


if __name__ == "__main__":
    key = jax.random.PRNGKey(0)
    k1, k2, k3, k4 = jax.random.split(key, 4)

    N, D = 1024, 128
    inp = jax.random.normal(k1, (N, D), dtype=jnp.float32)
    tgt = jax.random.normal(k2, (N, D), dtype=jnp.float32)
    var_full = jnp.abs(jax.random.normal(k3, (N, D), dtype=jnp.float32)) + 0.1
    var_col = jnp.abs(jax.random.normal(k4, (N, 1), dtype=jnp.float32)) + 0.1

    cases = [
        dict(var=var_full, reduction="mean", full=False),
        dict(var=var_full, reduction="sum", full=False),
        dict(var=var_col, reduction="none", full=False),
        dict(var=var_full, reduction="mean", full=True),
    ]
    for c in cases:
        out = jax.block_until_ready(
            gaussian_nll_loss(inp, tgt, c["var"], full=c["full"], reduction=c["reduction"]))
        ref = _reference(inp, tgt, c["var"], full=c["full"], reduction=c["reduction"])
        assert jnp.allclose(out, ref, rtol=1e-4, atol=1e-4), (c["reduction"], out, ref)

    # Unaligned batch + forced small tiles: exercises padded-row masking on both halves
    # of the 2-way core split (mean/sum), the clamped index_map for the shorter core,
    # the (N, 1) per-sample-variance lane broadcast, and the clipped partial output
    # block for reduction='none'.
    Np = 1000
    for red, v in (("mean", var_col), ("sum", var_full), ("none", var_full)):
        out = jax.block_until_ready(
            gaussian_nll_loss(inp[:Np], tgt[:Np], v[:Np], reduction=red, max_tile_rows=128))
        ref = _reference(inp[:Np], tgt[:Np], v[:Np], reduction=red)
        assert jnp.allclose(out, ref, rtol=1e-4, atol=1e-4), (red, out, ref)

    print("KERNEL_OK")
</pallas_src>

<mosaic_0001>
module attributes {stable_mosaic.version = 11 : i64} {
  func.func @_nll_reduce_kernel(%arg0: i32, %arg1: i32, %arg2: memref<512x128xf32, #tpu.memory_space<vmem>>, %arg3: memref<512x128xf32, #tpu.memory_space<vmem>>, %arg4: memref<512x128xf32, #tpu.memory_space<vmem>>, %arg5: memref<8x128xf32, #tpu.memory_space<vmem>>, %arg6: memref<512x1xf32, #tpu.memory_space<vmem>>) attributes {dimension_semantics = [#tpu.dimension_semantics<parallel>, #tpu.dimension_semantics<arbitrary>], iteration_bounds = array<i64: 2, 1>, scalar_prefetch = 0 : i64, scratch_operands = 1 : i64, tpu.core_type = #tpu.core_type<tc>, window_params = [{transform_indices = @transform_0, window_bounds = array<i64: 512, 128>}, {transform_indices = @transform_1, window_bounds = array<i64: 512, 128>}, {transform_indices = @transform_2, window_bounds = array<i64: 512, 128>}, {transform_indices = @transform_3, window_bounds = array<i64: 8, 128>}]} {
    %c0_i32 = arith.constant 0 : i32
    %0 = arith.cmpi eq, %arg1, %c0_i32 : i32
    %1 = arith.extui %0 : i1 to i32
    %c0_i32_0 = arith.constant 0 : i32
    %2 = arith.cmpi ne, %1, %c0_i32_0 : i32
    scf.if %2 {
      %cst_14 = arith.constant 0.000000e+00 : f32
      %32 = vector.broadcast %cst_14 : f32 to vector<512x1xf32>
      %c0_15 = arith.constant 0 : index
      %c0_16 = arith.constant 0 : index
      %33 = vector.load %arg6[%c0_15, %c0_16] : memref<512x1xf32, #tpu.memory_space<vmem>>, vector<512x1xf32>
      tpu.vector_store %arg6[%c0_15, %c0_16], %32 {strides = array<i32>} : memref<512x1xf32, #tpu.memory_space<vmem>>, vector<512x1xf32>,
    } else {
    }
    %c0 = arith.constant 0 : index
    %c0_1 = arith.constant 0 : index
    %3 = vector.load %arg2[%c0, %c0_1] : memref<512x128xf32, #tpu.memory_space<vmem>>, vector<512x128xf32>
    %c0_2 = arith.constant 0 : index
    %c0_3 = arith.constant 0 : index
    %4 = vector.load %arg3[%c0_2, %c0_3] : memref<512x128xf32, #tpu.memory_space<vmem>>, vector<512x128xf32>
    %c0_4 = arith.constant 0 : index
    %c0_5 = arith.constant 0 : index
    %5 = vector.load %arg4[%c0_4, %c0_5] : memref<512x128xf32, #tpu.memory_space<vmem>>, vector<512x128xf32>
    %cst = arith.constant 9.99999993E-9 : f32
    %6 = vector.broadcast %cst : f32 to vector<512x128xf32>
    %7 = arith.addf %5, %6 : vector<512x128xf32>
    %8 = arith.subf %3, %4 : vector<512x128xf32>
    %9 = math.log %7 : vector<512x128xf32>
    %10 = arith.mulf %8, %8 : vector<512x128xf32>
    %11 = tpu.reciprocal %7 : vector<512x128xf32> -> vector<512x128xf32>
    %12 = arith.mulf %10, %11 : vector<512x128xf32>
    %13 = arith.addf %9, %12 : vector<512x128xf32>
    %cst_6 = arith.constant dense<0.000000e+00> : vector<512xf32>
    %14 = vector.multi_reduction <add>, %13, %cst_6 [1] : vector<512x128xf32> to vector<512xf32>
    %15 = vector.shape_cast %14 : vector<512xf32> to vector<512x1xf32>
    %c1_i32 = arith.constant 1 : i32
    %16 = arith.muli %arg0, %c1_i32 : i32
    %17 = arith.addi %16, %arg1 : i32
    %c512_i32 = arith.constant 512 : i32
    %18 = arith.muli %17, %c512_i32 : i32
    %19 = tpu.iota {dimensions = array<i32: 0>} : vector<512x1xi32>
    %20 = vector.broadcast %18 : i32 to vector<512x1xi32>
    %21 = arith.addi %20, %19 : vector<512x1xi32>
    %c1024_i32 = arith.constant 1024 : i32
    %22 = vector.broadcast %c1024_i32 : i32 to vector<512x1xi32>
    %23 = arith.cmpi slt, %21, %22 : vector<512x1xi32>
    %cst_7 = arith.constant 0.000000e+00 : f32
    %24 = vector.broadcast %cst_7 : f32 to vector<512x1xf32>
    %25 = arith.select %23, %15, %24 : vector<512x1xi1>, vector<512x1xf32>
    %c0_8 = arith.constant 0 : index
    %c0_9 = arith.constant 0 : index
    %26 = vector.load %arg6[%c0_8, %c0_9] : memref<512x1xf32, #tpu.memory_space<vmem>>, vector<512x1xf32>
    %27 = arith.addf %26, %25 : vector<512x1xf32>
    %c0_10 = arith.constant 0 : index
    %c0_11 = arith.constant 0 : index
    %28 = vector.load %arg6[%c0_10, %c0_11] : memref<512x1xf32, #tpu.memory_space<vmem>>, vector<512x1xf32>
    tpu.vector_store %arg6[%c0_10, %c0_11], %27 {strides = array<i32>} : memref<512x1xf32, #tpu.memory_space<vmem>>, vector<512x1xf32>,
    %c0_i32_12 = arith.constant 0 : i32
    %29 = arith.cmpi eq, %arg1, %c0_i32_12 : i32
    %30 = arith.extui %29 : i1 to i32
    %c0_i32_13 = arith.constant 0 : i32
    %31 = arith.cmpi ne, %30, %c0_i32_13 : i32
    scf.if %31 {
      %c0_14 = arith.constant 0 : index
      %c0_15 = arith.constant 0 : index
      %32 = vector.load %arg6[%c0_14, %c0_15] : memref<512x1xf32, #tpu.memory_space<vmem>>, vector<512x1xf32>
      %33 = vector.shape_cast %32 : vector<512x1xf32> to vector<1x512x1xf32>
      %cst_16 = arith.constant dense<0.000000e+00> : vector<1xf32>
      %34 = vector.multi_reduction <add>, %33, %cst_16 [1, 2] : vector<1x512x1xf32> to vector<1xf32>
      %35 = vector.shape_cast %34 : vector<1xf32> to vector<1x1x1xf32>
      %36 = vector.extract %35[0, 0, 0] : f32 from vector<1x1x1xf32>
      %37 = vector.broadcast %36 : f32 to vector<8x128xf32>
      %c0_17 = arith.constant 0 : index
      %c0_18 = arith.constant 0 : index
      %38 = vector.load %arg5[%c0_17, %c0_18] : memref<8x128xf32, #tpu.memory_space<vmem>>, vector<8x128xf32>
      tpu.vector_store %arg5[%c0_17, %c0_18], %37 {strides = array<i32>} : memref<8x128xf32, #tpu.memory_space<vmem>>, vector<8x128xf32>,
    } else {
    }
    return
  }
  func.func @transform_0(%arg0: i32, %arg1: i32) -> (i32, i32) {
    %c1_i32 = arith.constant 1 : i32
    %0 = arith.muli %arg0, %c1_i32 : i32
    %1 = arith.addi %0, %arg1 : i32
    %c1_i32_0 = arith.constant 1 : i32
    %2 = arith.minsi %1, %c1_i32_0 : i32
    %c0_i32 = arith.constant 0 : i32
    %c0_i32_1 = arith.constant 0 : i32
    return %2, %c0_i32 : i32, i32
  }
  func.func @transform_1(%arg0: i32, %arg1: i32) -> (i32, i32) {
    %c1_i32 = arith.constant 1 : i32
    %0 = arith.muli %arg0, %c1_i32 : i32
    %1 = arith.addi %0, %arg1 : i32
    %c1_i32_0 = arith.constant 1 : i32
    %2 = arith.minsi %1, %c1_i32_0 : i32
    %c0_i32 = arith.constant 0 : i32
    %c0_i32_1 = arith.constant 0 : i32
    return %2, %c0_i32 : i32, i32
  }
  func.func @transform_2(%arg0: i32, %arg1: i32) -> (i32, i32) {
    %c1_i32 = arith.constant 1 : i32
    %0 = arith.muli %arg0, %c1_i32 : i32
    %1 = arith.addi %0, %arg1 : i32
    %c1_i32_0 = arith.constant 1 : i32
    %2 = arith.minsi %1, %c1_i32_0 : i32
    %c0_i32 = arith.constant 0 : i32
    %c0_i32_1 = arith.constant 0 : i32
    return %2, %c0_i32 : i32, i32
  }
  func.func @transform_3(%arg0: i32, %arg1: i32) -> (i32, i32) {
    %c0_i32 = arith.constant 0 : i32
    %c0_i32_0 = arith.constant 0 : i32
    return %arg0, %c0_i32 : i32, i32
  }
}

</mosaic_0001>

<llo_original>
// kernel: tpu_custom_call.1
$region0: #{tpu_custom_call.1}
  #allocation0 [shape = 'u32[]', space=smem, size = 0x4, offset = 0x4, fixed_abs, tag = 'smem constant byte address 0x4 - core index']
  #allocation1 [shape = 'u32[144,128]{1,0:T(1,128)}', space=vmem, size = 0x12000, scoped, tag = 'internal scratch']
  #allocation2 [shape = 'f32[512,1]{1,0:T(8,128)}', space=vmem, size = 0x40000, scoped, tag = 'scratch operand']
  %s0 = inlined_call_operand.hbm [shape: f32[1024,128], index: 0, kind: input, shape index: {}]
  %s1 = inlined_call_operand.hbm [shape: f32[1024,128], index: 1, kind: input, shape index: {}]
  %s2 = inlined_call_operand.hbm [shape: f32[1024,128], index: 2, kind: input, shape index: {}]
  %s3 = inlined_call_operand.hbm [shape: f32[16,128], index: 3, kind: output, shape index: {}]
  %s4 = sld [smem:[#allocation0]]
  $region65: #{tpu_custom_call.1} parent=0
    _
  %s6 = ssub.s32 1, %s4
  %s7 = scalar_select 0, %s6, %s4
  $region1: #{tpu_custom_call.1} parent=0
    #allocation3 [shape = 'u8[524288]{0}', space=vmem, size = 0x80000, scoped, tag = 'input window, operand 0']
    #allocation4 [shape = 's32[2]{0}', space=sflag, size = 0x8, scoped, tag = 'scoped memory for tpu_custom_call.1']
    #allocation5 [shape = 's32[2]{0}', space=sflag, size = 0x8, scoped, tag = 'scoped memory for tpu_custom_call.1']
    #allocation6 [shape = 'u8[524288]{0}', space=vmem, size = 0x80000, scoped, tag = 'input window, operand 1']
    #allocation7 [shape = 's32[2]{0}', space=sflag, size = 0x8, scoped, tag = 'scoped memory for tpu_custom_call.1']
    #allocation8 [shape = 'u8[524288]{0}', space=vmem, size = 0x80000, scoped, tag = 'input window, operand 2']
    #allocation9 [shape = 'u8[8192]{0}', space=vmem, size = 0x2000, scoped, tag = 'output window, operand 0']
    %8 = vsyncpa [#allocation4], 0
    %s9 = scalar_lea.sflag [#allocation4], 1
    %10 = vsyncpa %s9, 0
    %11 = vsyncpa [#allocation7], 0
    %s12 = scalar_lea.sflag [#allocation7], 1
    %13 = vsyncpa %s12, 0
    %14 = vsyncpa [#allocation5], 0
    %s15 = scalar_lea.sflag [#allocation5], 1
    %16 = vsyncpa %s15, 0
    loop: start=0, step=1, limit=4
    $region2: #{tpu_custom_call.1} parent=1 // loop_pre_header
      _
    $region3: #{tpu_custom_call.1} parent=1 // loop_header
      %s18 = sphi 0, %s22
      %p19 = scmp.ge.s32.totalorder %s18, 4
      %s25 = sphi 0, %s37
      %s26 = sphi 0, %s33
      %s27 = sphi 0, %s25
      %s28 = sphi 0, %s26
      %s29 = sphi 0, %s27
      %s30 = sphi 0, %s28
      %s46 = sphi 0, %s48
      %s49 = sphi 0, %s46
      %s50 = sphi 0, %s49
      %s66 = sphi 0, %s50
      %s78 = sphi 0, %s80
      %s81 = sphi 0, %s78
      %s82 = sphi 0, %s81
      %s98 = sphi 0, %s82
      %s110 = sphi 0, %s112
      %s113 = sphi 0, %s110
      %s114 = sphi 0, %s113
      %s130 = sphi 0, %s114
      %s136 = sphi 0, %s138
      %s139 = sphi 0, %s136
      %s140 = sphi 0, %s139
      %s156 = sphi 0, %s140
    $region4: #{tpu_custom_call.1} parent=1 // loop_header_branch
      %21 = sbr.rel (%p19) target = $region8
    $region5: #{tpu_custom_call.1} parent=1 // loop_body
      %s23 = ssub.s32 %s18, 1
      %s24 = ssub.s32 %s18, 2
      %s31 = sadd.s32 1, %s26
      %p32 = scmp.ge.s32.totalorder %s31, 1
      %s33 = scalar_select %p32, 0, %s31
      %s34 = sadd.s32 1, %s25
      %s35 = scalar_select %p32, %s34, %s25
      %p36 = scmp.ge.s32.totalorder %s35, 2
      %s37 = scalar_select %p36, 0, %s35
      %s38 = sadd.s32 %s25, %s26
      %p39 = scmp.lt.s32.totalorder %s38, 1
      %s40 = scalar_select %p39, %s38, 1
      %s41 = sadd.s32 %s37, %s33
      %p42 = scmp.lt.s32.totalorder %s41, 1
      %s43 = scalar_select %p42, %s41, 1
      %s44 = ssub.s32 %s40, %s43
      %p45 = scmp.eq.s32.totalorder %s44, 0
      %s47 = sadd.s32 %s46, 1
      %s48 = scalar_select %p45, %s46, %s47
      %p51 = pneg %p45
      %p52 = scmp.eq.s32.totalorder %s18, 1
      %p53 = por %p51, %p52
      %p54 = scmp.ne.s32.totalorder %s46, %s49
      %p55 = scmp.eq.s32.totalorder %s18, 0
      %p56 = por %p54, %p55
      %p57 = scmp.ne.s32.totalorder %s46, %s49
      %p58 = scmp.eq.s32.totalorder %s23, 1
      %p59 = por %p57, %p58
      %p60 = scmp.ne.s32.totalorder %s49, %s50
      %p61 = scmp.eq.s32.totalorder %s23, 0
      %p62 = por %p60, %p61
      %p63 = scmp.ne.s32.totalorder %s49, %s50
      %p64 = scmp.eq.s32.totalorder %s24, 1
      %p65 = por %p63, %p64
      %p67 = scmp.ne.s32.totalorder %s50, %s66
      %p68 = scmp.eq.s32.totalorder %s24, 0
      %p69 = por %p67, %p68
      %s70 = sadd.s32 %s25, %s26
      %p71 = scmp.lt.s32.totalorder %s70, 1
      %s72 = scalar_select %p71, %s70, 1
      %s73 = sadd.s32 %s37, %s33
      %p74 = scmp.lt.s32.totalorder %s73, 1
      %s75 = scalar_select %p74, %s73, 1
      %s76 = ssub.s32 %s72, %s75
      %p77 = scmp.eq.s32.totalorder %s76, 0
      %s79 = sadd.s32 %s78, 1
      %s80 = scalar_select %p77, %s78, %s79
      %p83 = pneg %p77
      %p84 = scmp.eq.s32.totalorder %s18, 1
      %p85 = por %p83, %p84
      %p86 = scmp.ne.s32.totalorder %s78, %s81
      %p87 = scmp.eq.s32.totalorder %s18, 0
      %p88 = por %p86, %p87
      %p89 = scmp.ne.s32.totalorder %s78, %s81
      %p90 = scmp.eq.s32.totalorder %s23, 1
      %p91 = por %p89, %p90
      %p92 = scmp.ne.s32.totalorder %s81, %s82
      %p93 = scmp.eq.s32.totalorder %s23, 0
      %p94 = por %p92, %p93
      %p95 = scmp.ne.s32.totalorder %s81, %s82
      %p96 = scmp.eq.s32.totalorder %s24, 1
      %p97 = por %p95, %p96
      %p99 = scmp.ne.s32.totalorder %s82, %s98
      %p100 = scmp.eq.s32.totalorder %s24, 0
      %p101 = por %p99, %p100
      %s102 = sadd.s32 %s25, %s26
      %p103 = scmp.lt.s32.totalorder %s102, 1
      %s104 = scalar_select %p103, %s102, 1
      %s105 = sadd.s32 %s37, %s33
      %p106 = scmp.lt.s32.totalorder %s105, 1
      %s107 = scalar_select %p106, %s105, 1
      %s108 = ssub.s32 %s104, %s107
      %p109 = scmp.eq.s32.totalorder %s108, 0
      %s111 = sadd.s32 %s110, 1
      %s112 = scalar_select %p109, %s110, %s111
      %p115 = pneg %p109
      %p116 = scmp.eq.s32.totalorder %s18, 1
      %p117 = por %p115, %p116
      %p118 = scmp.ne.s32.totalorder %s110, %s113
      %p119 = scmp.eq.s32.totalorder %s18, 0
      %p120 = por %p118, %p119
      %p121 = scmp.ne.s32.totalorder %s110, %s113
      %p122 = scmp.eq.s32.totalorder %s23, 1
      %p123 = por %p121, %p122
      %p124 = scmp.ne.s32.totalorder %s113, %s114
      %p125 = scmp.eq.s32.totalorder %s23, 0
      %p126 = por %p124, %p125
      %p127 = scmp.ne.s32.totalorder %s113, %s114
      %p128 = scmp.eq.s32.totalorder %s24, 1
      %p129 = por %p127, %p128
      %p131 = scmp.ne.s32.totalorder %s114, %s130
      %p132 = scmp.eq.s32.totalorder %s24, 0
      %p133 = por %p131, %p132
      %s134 = ssub.s32 %s25, %s37
      %p135 = scmp.eq.s32.totalorder %s134, 0
      %s137 = sadd.s32 %s136, 1
      %s138 = scalar_select %p135, %s136, %s137
      %p141 = pneg %p135
      %p142 = scmp.eq.s32.totalorder %s18, 1
      %p143 = por %p141, %p142
      %p144 = scmp.ne.s32.totalorder %s136, %s139
      %p145 = scmp.eq.s32.totalorder %s18, 0
      %p146 = por %p144, %p145
      %p147 = scmp.ne.s32.totalorder %s136, %s139
      %p148 = scmp.eq.s32.totalorder %s23, 1
      %p149 = por %p147, %p148
      %p150 = scmp.ne.s32.totalorder %s139, %s140
      %p151 = scmp.eq.s32.totalorder %s23, 0
      %p152 = por %p150, %p151
      %p153 = scmp.ne.s32.totalorder %s139, %s140
      %p154 = scmp.eq.s32.totalorder %s24, 1
      %p155 = por %p153, %p154
      %p157 = scmp.ne.s32.totalorder %s140, %s156
      %p158 = scmp.eq.s32.totalorder %s24, 0
      %p159 = por %p157, %p158
      %p160 = scmp.le.s32.totalorder 1, %s18
      %p161 = scmp.lt.s32.totalorder %s18, 3
      %p162 = pnand %p160, %p161
      %p163 = pneg %p162
      // Predicated region
      $region9: #{tpu_custom_call.1} parent=5 // pred_check
        _
      $region10: #{tpu_custom_call.1} parent=5 // pred_check_branch
        %165 = sbr.rel (%p162) target = $region12
      $region11: #{tpu_custom_call.1} parent=5 // pred_region
        %s166 = ssub.s32 %s18, 1
      $region12: #{tpu_custom_call.1} parent=5 // pred_fallthru
        _
      %p167 = scmp.lt.s32.totalorder %s18, 2
      // Predicated region
      $region13: #{tpu_custom_call.1} parent=5 // pred_check
        %p168 = pneg %p167
      $region14: #{tpu_custom_call.1} parent=5 // pred_check_branch
        %170 = sbr.rel (%p168) target = $region16
      $region15: #{tpu_custom_call.1} parent=5 // pred_region
        // Predicated region
        $region17: #{tpu_custom_call.1} parent=15 // pred_check
          %p171 = pneg %p56
        $region18: #{tpu_custom_call.1} parent=15 // pred_check_branch
          %173 = sbr.rel (%p171) target = $region20
        $region19: #{tpu_custom_call.1} parent=15 // pred_region
          %s174 = sand.u32 %s46, 1
          %s175 = scalar_lea.sflag [#allocation4], %s174
          %s176 = sand.u32 %s46, 1
          %s177 = smul.addr %s176, 512
          %s178 = scalar_lea.vmem [#allocation3], %s177
          %s179 = sadd.s32 %s25, %s26
          %p180 = scmp.lt.s32.totalorder %s179, 1
          %s181 = scalar_select %p180, %s179, 1
          %s182 = smul.u32 64, %s181
          %s184 = ssub.s32 8192, 8192
          %185 = vsyncadd %s175, %s184
          %s186 = smul.addr %s182, 128
          %s187 = scalar_lea.hbm %s0, %s186
          %s188 = sshll.u32 %s178, 4
          %s189 = int_to_ptr.vmem [resolvable:$true] %s188
          %194 = dma.hbm_to_vmem [thread:$0]  %s187, 8192, %s189, %s175, 128, 128, 8
        $region20: #{tpu_custom_call.1} parent=15 // pred_fallthru
          _
        // Predicated region
        $region21: #{tpu_custom_call.1} parent=15 // pred_check
          %p195 = pneg %p88
        $region22: #{tpu_custom_call.1} parent=15 // pred_check_branch
          %197 = sbr.rel (%p195) target = $region24
        $region23: #{tpu_custom_call.1} parent=15 // pred_region
          %s198 = sand.u32 %s18, 1
          %s199 = scalar_lea.sflag [#allocation7], %s198
          %s200 = sand.u32 %s78, 1
          %s201 = smul.addr %s200, 512
          %s202 = scalar_lea.vmem [#allocation6], %s201
          %s203 = sadd.s32 %s25, %s26
          %p204 = scmp.lt.s32.totalorder %s203, 1
          %s205 = scalar_select %p204, %s203, 1
          %s206 = smul.u32 64, %s205
          %s208 = ssub.s32 8192, 8192
          %209 = vsyncadd %s199, %s208
          %s210 = smul.addr %s206, 128
          %s211 = scalar_lea.hbm %s1, %s210
          %s212 = sshll.u32 %s202, 4
          %s213 = int_to_ptr.vmem [resolvable:$true] %s212
          %218 = dma.hbm_to_vmem [thread:$0]  %s211, 8192, %s213, %s199, 128, 128, 8
        $region24: #{tpu_custom_call.1} parent=15 // pred_fallthru
          _
        // Predicated region
        $region25: #{tpu_custom_call.1} parent=15 // pred_check
          %p219 = pneg %p120
        $region26: #{tpu_custom_call.1} parent=15 // pred_check_branch
          %221 = sbr.rel (%p219) target = $region28
        $region27: #{tpu_custom_call.1} parent=15 // pred_region
          %s222 = sand.u32 %s18, 1
          %s223 = scalar_lea.sflag [#allocation7], %s222
          %s224 = sand.u32 %s110, 1
          %s225 = smul.addr %s224, 512
          %s226 = scalar_lea.vmem [#allocation8], %s225
          %s227 = sadd.s32 %s25, %s26
          %p228 = scmp.lt.s32.totalorder %s227, 1
          %s229 = scalar_select %p228, %s227, 1
          %s230 = smul.u32 64, %s229
          %s232 = ssub.s32 8192, 8192
          %233 = vsyncadd %s223, %s232
          %s234 = smul.addr %s230, 128
          %s235 = scalar_lea.hbm %s2, %s234
          %s236 = sshll.u32 %s226, 4
          %s237 = int_to_ptr.vmem [resolvable:$true] %s236
          %242 = dma.hbm_to_vmem [thread:$0]  %s235, 8192, %s237, %s223, 128, 128, 8
        $region28: #{tpu_custom_call.1} parent=15 // pred_fallthru
          _
      $region16: #{tpu_custom_call.1} parent=5 // pred_fallthru
        _
      %p243 = scmp.le.s32.totalorder 1, %s18
      %p244 = scmp.lt.s32.totalorder %s18, 3
      %p245 = pnand %p243, %p244
      %p246 = pneg %p245
      // Predicated region
      $region29: #{tpu_custom_call.1} parent=5 // pred_check
        _
      $region30: #{tpu_custom_call.1} parent=5 // pred_check_branch
        %248 = sbr.rel (%p245) target = $region32
      $region31: #{tpu_custom_call.1} parent=5 // pred_region
        %s249 = ssub.s32 %s18, 1
        %s250 = sand.u32 %s49, 1
        %s251 = scalar_lea.sflag [#allocation4], %s250
        %s252 = sand.u32 %s49, 1
        %s253 = smul.addr %s252, 512
        %s254 = scalar_lea.vmem [#allocation3], %s253
        // Predicated region
        $region33: #{tpu_custom_call.1} parent=31 // pred_check
          %p255 = pneg %p62
        $region34: #{tpu_custom_call.1} parent=31 // pred_check_branch
          %257 = sbr.rel (%p255) target = $region36
        $region35: #{tpu_custom_call.1} parent=31 // pred_region
          %258 = dma.done %s251, 8192
        $region36: #{tpu_custom_call.1} parent=31 // pred_fallthru
          _
        %s259 = sand.u32 %s23, 1
        %s260 = scalar_lea.sflag [#allocation7], %s259
        %s261 = sand.u32 %s81, 1
        %s262 = smul.addr %s261, 512
        %s263 = scalar_lea.vmem [#allocation6], %s262
        // Predicated region
        $region37: #{tpu_custom_call.1} parent=31 // pred_check
          %p264 = pneg %p94
        $region38: #{tpu_custom_call.1} parent=31 // pred_check_branch
          %266 = sbr.rel (%p264) target = $region40
        $region39: #{tpu_custom_call.1} parent=31 // pred_region
          %267 = dma.done %s260, 8192
        $region40: #{tpu_custom_call.1} parent=31 // pred_fallthru
          _
        %s268 = sand.u32 %s23, 1
        %s269 = scalar_lea.sflag [#allocation7], %s268
        %s270 = sand.u32 %s113, 1
        %s271 = smul.addr %s270, 512
        %s272 = scalar_lea.vmem [#allocation8], %s271
        // Predicated region
        $region41: #{tpu_custom_call.1} parent=31 // pred_check
          %p273 = pneg %p126
        $region42: #{tpu_custom_call.1} parent=31 // pred_check_branch
          %275 = sbr.rel (%p273) target = $region44
        $region43: #{tpu_custom_call.1} parent=31 // pred_region
          %276 = dma.done %s269, 8192
        $region44: #{tpu_custom_call.1} parent=31 // pred_fallthru
          _
        %s277 = sand.u32 %s49, 1
        %s278 = scalar_lea.sflag [#allocation4], %s277
        %s279 = sand.u32 %s49, 1
        %s280 = smul.addr %s279, 512
        %s281 = scalar_lea.vmem [#allocation3], %s280
        %p282 = pneg %p62
        %p283 = pneg %p59
        %s284 = sand.u32 %s23, 1
        %s285 = scalar_lea.sflag [#allocation7], %s284
        %s286 = sand.u32 %s81, 1
        %s287 = smul.addr %s286, 512
        %s288 = scalar_lea.vmem [#allocation6], %s287
        %p289 = pneg %p94
        %p290 = pneg %p91
        %s291 = sand.u32 %s23, 1
        %s292 = scalar_lea.sflag [#allocation7], %s291
        %s293 = sand.u32 %s113, 1
        %s294 = smul.addr %s293, 512
        %s295 = scalar_lea.vmem [#allocation8], %s294
        %p296 = pneg %p126
        %p297 = pneg %p123
        %p298 = pneg %p152
        %p299 = pneg %p149
        %s300 = sand.u32 %s139, 1
        %s301 = scalar_lea.sflag [#allocation5], %s300
        %s302 = sand.u32 %s139, 1
        %s303 = smul.addr %s302, 8
        %s304 = scalar_lea.vmem [#allocation9], %s303
        %s305 = sadd.s32 %s27, %s28
        %p306 = scmp.lt.s32.totalorder %s305, 1
        %s307 = scalar_select %p306, %s305, 1
        %s308 = smul.u32 64, %s307
        %s309 = sadd.s32 %s27, %s28
        %p310 = scmp.lt.s32.totalorder %s309, 1
        %s311 = scalar_select %p310, %s309, 1
        %s312 = smul.u32 64, %s311
        %s313 = sadd.s32 %s27, %s28
        %p314 = scmp.lt.s32.totalorder %s313, 1
        %s315 = scalar_select %p314, %s313, 1
        %s316 = smul.u32 64, %s315
        %p317 = scmp.eq.s32.totalorder %s28, 0
        // Predicated region
        $region45: #{tpu_custom_call.1} parent=31 // pred_check
          %p318 = pneg %p317
        $region46: #{tpu_custom_call.1} parent=31 // pred_check_branch
          %320 = sbr.rel (%p318) target = $region48
        $region47: #{tpu_custom_call.1} parent=31 // pred_region
          %vm321 = vcmask 7168
          %322 = vst.msk [vmem:[#allocation2] sm:$0xff] %vm321, 0.0
          %323 = vst.msk [vmem:[#allocation2 + $0x8] sm:$0xff] %vm321, 0.0
          %324 = vst.msk [vmem:[#allocation2 + $0x10] sm:$0xff] %vm321, 0.0
          %325 = vst.msk [vmem:[#allocation2 + $0x18] sm:$0xff] %vm321, 0.0
          %326 = vst.msk [vmem:[#allocation2 + $0x20] sm:$0xff] %vm321, 0.0
          %327 = vst.msk [vmem:[#allocation2 + $0x28] sm:$0xff] %vm321, 0.0
          %328 = vst.msk [vmem:[#allocation2 + $0x30] sm:$0xff] %vm321, 0.0
          %329 = vst.msk [vmem:[#allocation2 + $0x38] sm:$0xff] %vm321, 0.0
          %330 = vst.msk [vmem:[#allocation2 + $0x40] sm:$0xff] %vm321, 0.0
          %331 = vst.msk [vmem:[#allocation2 + $0x48] sm:$0xff] %vm321, 0.0
          %332 = vst.msk [vmem:[#allocation2 + $0x50] sm:$0xff] %vm321, 0.0
          %333 = vst.msk [vmem:[#allocation2 + $0x58] sm:$0xff] %vm321, 0.0
          %334 = vst.msk [vmem:[#allocation2 + $0x60] sm:$0xff] %vm321, 0.0
          %335 = vst.msk [vmem:[#allocation2 + $0x68] sm:$0xff] %vm321, 0.0
          %336 = vst.msk [vmem:[#allocation2 + $0x70] sm:$0xff] %vm321, 0.0
          %337 = vst.msk [vmem:[#allocation2 + $0x78] sm:$0xff] %vm321, 0.0
          %338 = vst.msk [vmem:[#allocation2 + $0x80] sm:$0xff] %vm321, 0.0
          %339 = vst.msk [vmem:[#allocation2 + $0x88] sm:$0xff] %vm321, 0.0
          %340 = vst.msk [vmem:[#allocation2 + $0x90] sm:$0xff] %vm321, 0.0
          %341 = vst.msk [vmem:[#allocation2 + $0x98] sm:$0xff] %vm321, 0.0
          %342 = vst.msk [vmem:[#allocation2 + $0xa0] sm:$0xff] %vm321, 0.0
          %343 = vst.msk [vmem:[#allocation2 + $0xa8] sm:$0xff] %vm321, 0.0
          %344 = vst.msk [vmem:[#allocation2 + $0xb0] sm:$0xff] %vm321, 0.0
          %345 = vst.msk [vmem:[#allocation2 + $0xb8] sm:$0xff] %vm321, 0.0
          %346 = vst.msk [vmem:[#allocation2 + $0xc0] sm:$0xff] %vm321, 0.0
          %347 = vst.msk [vmem:[#allocation2 + $0xc8] sm:$0xff] %vm321, 0.0
          %348 = vst.msk [vmem:[#allocation2 + $0xd0] sm:$0xff] %vm321, 0.0
          %349 = vst.msk [vmem:[#allocation2 + $0xd8] sm:$0xff] %vm321, 0.0
          %350 = vst.msk [vmem:[#allocation2 + $0xe0] sm:$0xff] %vm321, 0.0
          %351 = vst.msk [vmem:[#allocation2 + $0xe8] sm:$0xff] %vm321, 0.0
          %352 = vst.msk [vmem:[#allocation2 + $0xf0] sm:$0xff] %vm321, 0.0
          %353 = vst.msk [vmem:[#allocation2 + $0xf8] sm:$0xff] %vm321, 0.0
          %354 = vst.msk [vmem:[#allocation2 + $0x100] sm:$0xff] %vm321, 0.0
          %355 = vst.msk [vmem:[#allocation2 + $0x108] sm:$0xff] %vm321, 0.0
          %356 = vst.msk [vmem:[#allocation2 + $0x110] sm:$0xff] %vm321, 0.0
          %357 = vst.msk [vmem:[#allocation2 + $0x118] sm:$0xff] %vm321, 0.0
          %358 = vst.msk [vmem:[#allocation2 + $0x120] sm:$0xff] %vm321, 0.0
          %359 = vst.msk [vmem:[#allocation2 + $0x128] sm:$0xff] %vm321, 0.0
          %360 = vst.msk [vmem:[#allocation2 + $0x130] sm:$0xff] %vm321, 0.0
          %361 = vst.msk [vmem:[#allocation2 + $0x138] sm:$0xff] %vm321, 0.0
          %362 = vst.msk [vmem:[#allocation2 + $0x140] sm:$0xff] %vm321, 0.0
          %363 = vst.msk [vmem:[#allocation2 + $0x148] sm:$0xff] %vm321, 0.0
          %364 = vst.msk [vmem:[#allocation2 + $0x150] sm:$0xff] %vm321, 0.0
          %365 = vst.msk [vmem:[#allocation2 + $0x158] sm:$0xff] %vm321, 0.0
          %366 = vst.msk [vmem:[#allocation2 + $0x160] sm:$0xff] %vm321, 0.0
          %367 = vst.msk [vmem:[#allocation2 + $0x168] sm:$0xff] %vm321, 0.0
          %368 = vst.msk [vmem:[#allocation2 + $0x170] sm:$0xff] %vm321, 0.0
          %369 = vst.msk [vmem:[#allocation2 + $0x178] sm:$0xff] %vm321, 0.0
          %370 = vst.msk [vmem:[#allocation2 + $0x180] sm:$0xff] %vm321, 0.0
          %371 = vst.msk [vmem:[#allocation2 + $0x188] sm:$0xff] %vm321, 0.0
          %372 = vst.msk [vmem:[#allocation2 + $0x190] sm:$0xff] %vm321, 0.0
          %373 = vst.msk [vmem:[#allocation2 + $0x198] sm:$0xff] %vm321, 0.0
          %374 = vst.msk [vmem:[#allocation2 + $0x1a0] sm:$0xff] %vm321, 0.0
          %375 = vst.msk [vmem:[#allocation2 + $0x1a8] sm:$0xff] %vm321, 0.0
          %376 = vst.msk [vmem:[#allocation2 + $0x1b0] sm:$0xff] %vm321, 0.0
          %377 = vst.msk [vmem:[#allocation2 + $0x1b8] sm:$0xff] %vm321, 0.0
          %378 = vst.msk [vmem:[#allocation2 + $0x1c0] sm:$0xff] %vm321, 0.0
          %379 = vst.msk [vmem:[#allocation2 + $0x1c8] sm:$0xff] %vm321, 0.0
          %380 = vst.msk [vmem:[#allocation2 + $0x1d0] sm:$0xff] %vm321, 0.0
          %381 = vst.msk [vmem:[#allocation2 + $0x1d8] sm:$0xff] %vm321, 0.0
          %382 = vst.msk [vmem:[#allocation2 + $0x1e0] sm:$0xff] %vm321, 0.0
          %383 = vst.msk [vmem:[#allocation2 + $0x1e8] sm:$0xff] %vm321, 0.0
          %384 = vst.msk [vmem:[#allocation2 + $0x1f0] sm:$0xff] %vm321, 0.0
          %385 = vst.msk [vmem:[#allocation2 + $0x1f8] sm:$0xff] %vm321, 0.0
        $region48: #{tpu_custom_call.1} parent=31 // pred_fallthru
          _
        %v386 = vld [vmem:[%s254] sm:$0xff]
        %v387 = vld [vmem:[%s254 + $0x8] sm:$0xff]
        %v388 = vld [vmem:[%s254 + $0x10] sm:$0xff]
        %v389 = vld [vmem:[%s254 + $0x18] sm:$0xff]
        %v390 = vld [vmem:[%s254 + $0x20] sm:$0xff]
        %v391 = vld [vmem:[%s254 + $0x28] sm:$0xff]
        %v392 = vld [vmem:[%s254 + $0x30] sm:$0xff]
        %v393 = vld [vmem:[%s254 + $0x38] sm:$0xff]
        %v394 = vld [vmem:[%s254 + $0x40] sm:$0xff]
        %v395 = vld [vmem:[%s254 + $0x48] sm:$0xff]
        %v396 = vld [vmem:[%s254 + $0x50] sm:$0xff]
        %v397 = vld [vmem:[%s254 + $0x58] sm:$0xff]
        %v398 = vld [vmem:[%s254 + $0x60] sm:$0xff]
        %v399 = vld [vmem:[%s254 + $0x68] sm:$0xff]
        %v400 = vld [vmem:[%s254 + $0x70] sm:$0xff]
        %v401 = vld [vmem:[%s254 + $0x78] sm:$0xff]
        %v402 = vld [vmem:[%s254 + $0x80] sm:$0xff]
        %v403 = vld [vmem:[%s254 + $0x88] sm:$0xff]
        %v404 = vld [vmem:[%s254 + $0x90] sm:$0xff]
        %v405 = vld [vmem:[%s254 + $0x98] sm:$0xff]
        %v406 = vld [vmem:[%s254 + $0xa0] sm:$0xff]
        %v407 = vld [vmem:[%s254 + $0xa8] sm:$0xff]
        %v408 = vld [vmem:[%s254 + $0xb0] sm:$0xff]
        %v409 = vld [vmem:[%s254 + $0xb8] sm:$0xff]
        %v410 = vld [vmem:[%s254 + $0xc0] sm:$0xff]
        %v411 = vld [vmem:[%s254 + $0xc8] sm:$0xff]
        %v412 = vld [vmem:[%s254 + $0xd0] sm:$0xff]
        %v413 = vld [vmem:[%s254 + $0xd8] sm:$0xff]
        %v414 = vld [vmem:[%s254 + $0xe0] sm:$0xff]
        %v415 = vld [vmem:[%s254 + $0xe8] sm:$0xff]
        %v416 = vld [vmem:[%s254 + $0xf0] sm:$0xff]
        %v417 = vld [vmem:[%s254 + $0xf8] sm:$0xff]
        %v418 = vld [vmem:[%s254 + $0x100] sm:$0xff]
        %v419 = vld [vmem:[%s254 + $0x108] sm:$0xff]
        %v420 = vld [vmem:[%s254 + $0x110] sm:$0xff]
        %v421 = vld [vmem:[%s254 + $0x118] sm:$0xff]
        %v422 = vld [vmem:[%s254 + $0x120] sm:$0xff]
        %v423 = vld [vmem:[%s254 + $0x128] sm:$0xff]
        %v424 = vld [vmem:[%s254 + $0x130] sm:$0xff]
        %v425 = vld [vmem:[%s254 + $0x138] sm:$0xff]
        %v426 = vld [vmem:[%s254 + $0x140] sm:$0xff]
        %v427 = vld [vmem:[%s254 + $0x148] sm:$0xff]
        %v428 = vld [vmem:[%s254 + $0x150] sm:$0xff]
        %v429 = vld [vmem:[%s254 + $0x158] sm:$0xff]
        %v430 = vld [vmem:[%s254 + $0x160] sm:$0xff]
        %v431 = vld [vmem:[%s254 + $0x168] sm:$0xff]
        %v432 = vld [vmem:[%s254 + $0x170] sm:$0xff]
        %v433 = vld [vmem:[%s254 + $0x178] sm:$0xff]
        %v434 = vld [vmem:[%s254 + $0x180] sm:$0xff]
        %v435 = vld [vmem:[%s254 + $0x188] sm:$0xff]
        %v436 = vld [vmem:[%s254 + $0x190] sm:$0xff]
        %v437 = vld [vmem:[%s254 + $0x198] sm:$0xff]
        %v438 = vld [vmem:[%s254 + $0x1a0] sm:$0xff]
        %v439 = vld [vmem:[%s254 + $0x1a8] sm:$0xff]
        %v440 = vld [vmem:[%s254 + $0x1b0] sm:$0xff]
        %v441 = vld [vmem:[%s254 + $0x1b8] sm:$0xff]
        %v442 = vld [vmem:[%s254 + $0x1c0] sm:$0xff]
        %v443 = vld [vmem:[%s254 + $0x1c8] sm:$0xff]
        %v444 = vld [vmem:[%s254 + $0x1d0] sm:$0xff]
        %v445 = vld [vmem:[%s254 + $0x1d8] sm:$0xff]
        %v446 = vld [vmem:[%s254 + $0x1e0] sm:$0xff]
        %v447 = vld [vmem:[%s254 + $0x1e8] sm:$0xff]
        %v448 = vld [vmem:[%s254 + $0x1f0] sm:$0xff]
        %v449 = vld [vmem:[%s254 + $0x1f8] sm:$0xff]
        %v450 = vld [vmem:[%s263] sm:$0xff]
        %v451 = vld [vmem:[%s263 + $0x8] sm:$0xff]
        %v452 = vld [vmem:[%s263 + $0x10] sm:$0xff]
        %v453 = vld [vmem:[%s263 + $0x18] sm:$0xff]
        %v454 = vld [vmem:[%s263 + $0x20] sm:$0xff]
        %v455 = vld [vmem:[%s263 + $0x28] sm:$0xff]
        %v456 = vld [vmem:[%s263 + $0x30] sm:$0xff]
        %v457 = vld [vmem:[%s263 + $0x38] sm:$0xff]
        %v458 = vld [vmem:[%s263 + $0x40] sm:$0xff]
        %v459 = vld [vmem:[%s263 + $0x48] sm:$0xff]
        %v460 = vld [vmem:[%s263 + $0x50] sm:$0xff]
        %v461 = vld [vmem:[%s263 + $0x58] sm:$0xff]
        %v462 = vld [vmem:[%s263 + $0x60] sm:$0xff]
        %v463 = vld [vmem:[%s263 + $0x68] sm:$0xff]
        %v464 = vld [vmem:[%s263 + $0x70] sm:$0xff]
        %v465 = vld [vmem:[%s263 + $0x78] sm:$0xff]
        %v466 = vld [vmem:[%s263 + $0x80] sm:$0xff]
        %v467 = vld [vmem:[%s263 + $0x88] sm:$0xff]
        %v468 = vld [vmem:[%s263 + $0x90] sm:$0xff]
        %v469 = vld [vmem:[%s263 + $0x98] sm:$0xff]
        %v470 = vld [vmem:[%s263 + $0xa0] sm:$0xff]
        %v471 = vld [vmem:[%s263 + $0xa8] sm:$0xff]
        %v472 = vld [vmem:[%s263 + $0xb0] sm:$0xff]
        %v473 = vld [vmem:[%s263 + $0xb8] sm:$0xff]
        %v474 = vld [vmem:[%s263 + $0xc0] sm:$0xff]
        %v475 = vld [vmem:[%s263 + $0xc8] sm:$0xff]
        %v476 = vld [vmem:[%s263 + $0xd0] sm:$0xff]
        %v477 = vld [vmem:[%s263 + $0xd8] sm:$0xff]
        %v478 = vld [vmem:[%s263 + $0xe0] sm:$0xff]
        %v479 = vld [vmem:[%s263 + $0xe8] sm:$0xff]
        %v480 = vld [vmem:[%s263 + $0xf0] sm:$0xff]
        %v481 = vld [vmem:[%s263 + $0xf8] sm:$0xff]
        %v482 = vld [vmem:[%s263 + $0x100] sm:$0xff]
        %v483 = vld [vmem:[%s263 + $0x108] sm:$0xff]
        %v484 = vld [vmem:[%s263 + $0x110] sm:$0xff]
        %v485 = vld [vmem:[%s263 + $0x118] sm:$0xff]
        %v486 = vld [vmem:[%s263 + $0x120] sm:$0xff]
        %v487 = vld [vmem:[%s263 + $0x128] sm:$0xff]
        %v488 = vld [vmem:[%s263 + $0x130] sm:$0xff]
        %v489 = vld [vmem:[%s263 + $0x138] sm:$0xff]
        %v490 = vld [vmem:[%s263 + $0x140] sm:$0xff]
        %v491 = vld [vmem:[%s263 + $0x148] sm:$0xff]
        %v492 = vld [vmem:[%s263 + $0x150] sm:$0xff]
        %v493 = vld [vmem:[%s263 + $0x158] sm:$0xff]
        %v494 = vld [vmem:[%s263 + $0x160] sm:$0xff]
        %v495 = vld [vmem:[%s263 + $0x168] sm:$0xff]
        %v496 = vld [vmem:[%s263 + $0x170] sm:$0xff]
        %v497 = vld [vmem:[%s263 + $0x178] sm:$0xff]
        %v498 = vld [vmem:[%s263 + $0x180] sm:$0xff]
        %v499 = vld [vmem:[%s263 + $0x188] sm:$0xff]
        %v500 = vld [vmem:[%s263 + $0x190] sm:$0xff]
        %v501 = vld [vmem:[%s263 + $0x198] sm:$0xff]
        %v502 = vld [vmem:[%s263 + $0x1a0] sm:$0xff]
        %v503 = vld [vmem:[%s263 + $0x1a8] sm:$0xff]
        %v504 = vld [vmem:[%s263 + $0x1b0] sm:$0xff]
        %v505 = vld [vmem:[%s263 + $0x1b8] sm:$0xff]
        %v506 = vld [vmem:[%s263 + $0x1c0] sm:$0xff]
        %v507 = vld [vmem:[%s263 + $0x1c8] sm:$0xff]
        %v508 = vld [vmem:[%s263 + $0x1d0] sm:$0xff]
        %v509 = vld [vmem:[%s263 + $0x1d8] sm:$0xff]
        %v510 = vld [vmem:[%s263 + $0x1e0] sm:$0xff]
        %v511 = vld [vmem:[%s263 + $0x1e8] sm:$0xff]
        %v512 = vld [vmem:[%s263 + $0x1f0] sm:$0xff]
        %v513 = vld [vmem:[%s263 + $0x1f8] sm:$0xff]
        %v514 = vld [vmem:[%s272] sm:$0xff]
        %v515 = vld [vmem:[%s272 + $0x8] sm:$0xff]
        %v516 = vld [vmem:[%s272 + $0x10] sm:$0xff]
        %v517 = vld [vmem:[%s272 + $0x18] sm:$0xff]
        %v518 = vld [vmem:[%s272 + $0x20] sm:$0xff]
        %v519 = vld [vmem:[%s272 + $0x28] sm:$0xff]
        %v520 = vld [vmem:[%s272 + $0x30] sm:$0xff]
        %v521 = vld [vmem:[%s272 + $0x38] sm:$0xff]
        %v522 = vld [vmem:[%s272 + $0x40] sm:$0xff]
        %v523 = vld [vmem:[%s272 + $0x48] sm:$0xff]
        %v524 = vld [vmem:[%s272 + $0x50] sm:$0xff]
        %v525 = vld [vmem:[%s272 + $0x58] sm:$0xff]
        %v526 = vld [vmem:[%s272 + $0x60] sm:$0xff]
        %v527 = vld [vmem:[%s272 + $0x68] sm:$0xff]
        %v528 = vld [vmem:[%s272 + $0x70] sm:$0xff]
        %v529 = vld [vmem:[%s272 + $0x78] sm:$0xff]
        %v530 = vld [vmem:[%s272 + $0x80] sm:$0xff]
        %v531 = vld [vmem:[%s272 + $0x88] sm:$0xff]
        %v532 = vld [vmem:[%s272 + $0x90] sm:$0xff]
        %v533 = vld [vmem:[%s272 + $0x98] sm:$0xff]
        %v534 = vld [vmem:[%s272 + $0xa0] sm:$0xff]
        %v535 = vld [vmem:[%s272 + $0xa8] sm:$0xff]
        %v536 = vld [vmem:[%s272 + $0xb0] sm:$0xff]
        %v537 = vld [vmem:[%s272 + $0xb8] sm:$0xff]
        %v538 = vld [vmem:[%s272 + $0xc0] sm:$0xff]
        %v539 = vld [vmem:[%s272 + $0xc8] sm:$0xff]
        %v540 = vld [vmem:[%s272 + $0xd0] sm:$0xff]
        %v541 = vld [vmem:[%s272 + $0xd8] sm:$0xff]
        %v542 = vld [vmem:[%s272 + $0xe0] sm:$0xff]
        %v543 = vld [vmem:[%s272 + $0xe8] sm:$0xff]
        %v544 = vld [vmem:[%s272 + $0xf0] sm:$0xff]
        %v545 = vld [vmem:[%s272 + $0xf8] sm:$0xff]
        %v546 = vld [vmem:[%s272 + $0x100] sm:$0xff]
        %v547 = vld [vmem:[%s272 + $0x108] sm:$0xff]
        %v548 = vld [vmem:[%s272 + $0x110] sm:$0xff]
        %v549 = vld [vmem:[%s272 + $0x118] sm:$0xff]
        %v550 = vld [vmem:[%s272 + $0x120] sm:$0xff]
        %v551 = vld [vmem:[%s272 + $0x128] sm:$0xff]
        %v552 = vld [vmem:[%s272 + $0x130] sm:$0xff]
        %v553 = vld [vmem:[%s272 + $0x138] sm:$0xff]
        %v554 = vld [vmem:[%s272 + $0x140] sm:$0xff]
        %v555 = vld [vmem:[%s272 + $0x148] sm:$0xff]
        %v556 = vld [vmem:[%s272 + $0x150] sm:$0xff]
        %v557 = vld [vmem:[%s272 + $0x158] sm:$0xff]
        %v558 = vld [vmem:[%s272 + $0x160] sm:$0xff]
        %v559 = vld [vmem:[%s272 + $0x168] sm:$0xff]
        %v560 = vld [vmem:[%s272 + $0x170] sm:$0xff]
        %v561 = vld [vmem:[%s272 + $0x178] sm:$0xff]
        %v562 = vld [vmem:[%s272 + $0x180] sm:$0xff]
        %v563 = vld [vmem:[%s272 + $0x188] sm:$0xff]
        %v564 = vld [vmem:[%s272 + $0x190] sm:$0xff]
        %v565 = vld [vmem:[%s272 + $0x198] sm:$0xff]
        %v566 = vld [vmem:[%s272 + $0x1a0] sm:$0xff]
        %v567 = vld [vmem:[%s272 + $0x1a8] sm:$0xff]
        %v568 = vld [vmem:[%s272 + $0x1b0] sm:$0xff]
        %v569 = vld [vmem:[%s272 + $0x1b8] sm:$0xff]
        %v570 = vld [vmem:[%s272 + $0x1c0] sm:$0xff]
        %v571 = vld [vmem:[%s272 + $0x1c8] sm:$0xff]
        %v572 = vld [vmem:[%s272 + $0x1d0] sm:$0xff]
        %v573 = vld [vmem:[%s272 + $0x1d8] sm:$0xff]
        %v574 = vld [vmem:[%s272 + $0x1e0] sm:$0xff]
        %v575 = vld [vmem:[%s272 + $0x1e8] sm:$0xff]
        %v576 = vld [vmem:[%s272 + $0x1f0] sm:$0xff]
        %v577 = vld [vmem:[%s272 + $0x1f8] sm:$0xff]
        %v578 = vadd.f32 %v514, 1e-08
        %v579 = vadd.f32 %v515, 1e-08
        %v580 = vadd.f32 %v516, 1e-08
        %v581 = vadd.f32 %v517, 1e-08
        %v582 = vadd.f32 %v518, 1e-08
        %v583 = vadd.f32 %v519, 1e-08
        %v584 = vadd.f32 %v520, 1e-08
        %v585 = vadd.f32 %v521, 1e-08
        %v586 = vadd.f32 %v522, 1e-08
        %v587 = vadd.f32 %v523, 1e-08
        %v588 = vadd.f32 %v524, 1e-08
        %v589 = vadd.f32 %v525, 1e-08
        %v590 = vadd.f32 %v526, 1e-08
        %v591 = vadd.f32 %v527, 1e-08
        %v592 = vadd.f32 %v528, 1e-08
        %v593 = vadd.f32 %v529, 1e-08
        %v594 = vadd.f32 %v530, 1e-08
        %v595 = vadd.f32 %v531, 1e-08
        %v596 = vadd.f32 %v532, 1e-08
        %v597 = vadd.f32 %v533, 1e-08
        %v598 = vadd.f32 %v534, 1e-08
        %v599 = vadd.f32 %v535, 1e-08
        %v600 = vadd.f32 %v536, 1e-08
        %v601 = vadd.f32 %v537, 1e-08
        %v602 = vadd.f32 %v538, 1e-08
        %v603 = vadd.f32 %v539, 1e-08
        %v604 = vadd.f32 %v540, 1e-08
        %v605 = vadd.f32 %v541, 1e-08
        %v606 = vadd.f32 %v542, 1e-08
        %v607 = vadd.f32 %v543, 1e-08
        %v608 = vadd.f32 %v544, 1e-08
        %v609 = vadd.f32 %v545, 1e-08
        %v610 = vadd.f32 %v546, 1e-08
        %v611 = vadd.f32 %v547, 1e-08
        %v612 = vadd.f32 %v548, 1e-08
        %v613 = vadd.f32 %v549, 1e-08
        %v614 = vadd.f32 %v550, 1e-08
        %v615 = vadd.f32 %v551, 1e-08
        %v616 = vadd.f32 %v552, 1e-08
        %v617 = vadd.f32 %v553, 1e-08
        %v618 = vadd.f32 %v554, 1e-08
        %v619 = vadd.f32 %v555, 1e-08
        %v620 = vadd.f32 %v556, 1e-08
        %v621 = vadd.f32 %v557, 1e-08
        %v622 = vadd.f32 %v558, 1e-08
        %v623 = vadd.f32 %v559, 1e-08
        %v624 = vadd.f32 %v560, 1e-08
        %v625 = vadd.f32 %v561, 1e-08
        %v626 = vadd.f32 %v562, 1e-08
        %v627 = vadd.f32 %v563, 1e-08
        %v628 = vadd.f32 %v564, 1e-08
        %v629 = vadd.f32 %v565, 1e-08
        %v630 = vadd.f32 %v566, 1e-08
        %v631 = vadd.f32 %v567, 1e-08
        %v632 = vadd.f32 %v568, 1e-08
        %v633 = vadd.f32 %v569, 1e-08
        %v634 = vadd.f32 %v570, 1e-08
        %v635 = vadd.f32 %v571, 1e-08
        %v636 = vadd.f32 %v572, 1e-08
        %v637 = vadd.f32 %v573, 1e-08
        %v638 = vadd.f32 %v574, 1e-08
        %v639 = vadd.f32 %v575, 1e-08
        %v640 = vadd.f32 %v576, 1e-08
        %v641 = vadd.f32 %v577, 1e-08
        %v642 = vsub.f32 %v386, %v450
        %v643 = vsub.f32 %v387, %v451
        %v644 = vsub.f32 %v388, %v452
        %v645 = vsub.f32 %v389, %v453
        %v646 = vsub.f32 %v390, %v454
        %v647 = vsub.f32 %v391, %v455
        %v648 = vsub.f32 %v392, %v456
        %v649 = vsub.f32 %v393, %v457
        %v650 = vsub.f32 %v394, %v458
        %v651 = vsub.f32 %v395, %v459
        %v652 = vsub.f32 %v396, %v460
        %v653 = vsub.f32 %v397, %v461
        %v654 = vsub.f32 %v398, %v462
        %v655 = vsub.f32 %v399, %v463
        %v656 = vsub.f32 %v400, %v464
        %v657 = vsub.f32 %v401, %v465
        %v658 = vsub.f32 %v402, %v466
        %v659 = vsub.f32 %v403, %v467
        %v660 = vsub.f32 %v404, %v468
        %v661 = vsub.f32 %v405, %v469
        %v662 = vsub.f32 %v406, %v470
        %v663 = vsub.f32 %v407, %v471
        %v664 = vsub.f32 %v408, %v472
        %v665 = vsub.f32 %v409, %v473
        %v666 = vsub.f32 %v410, %v474
        %v667 = vsub.f32 %v411, %v475
        %v668 = vsub.f32 %v412, %v476
        %v669 = vsub.f32 %v413, %v477
        %v670 = vsub.f32 %v414, %v478
        %v671 = vsub.f32 %v415, %v479
        %v672 = vsub.f32 %v416, %v480
        %v673 = vsub.f32 %v417, %v481
        %v674 = vsub.f32 %v418, %v482
        %v675 = vsub.f32 %v419, %v483
        %v676 = vsub.f32 %v420, %v484
        %v677 = vsub.f32 %v421, %v485
        %v678 = vsub.f32 %v422, %v486
        %v679 = vsub.f32 %v423, %v487
        %v680 = vsub.f32 %v424, %v488
        %v681 = vsub.f32 %v425, %v489
        %v682 = vsub.f32 %v426, %v490
        %v683 = vsub.f32 %v427, %v491
        %v684 = vsub.f32 %v428, %v492
        %v685 = vsub.f32 %v429, %v493
        %v686 = vsub.f32 %v430, %v494
        %v687 = vsub.f32 %v431, %v495
        %v688 = vsub.f32 %v432, %v496
        %v689 = vsub.f32 %v433, %v497
        %v690 = vsub.f32 %v434, %v498
        %v691 = vsub.f32 %v435, %v499
        %v692 = vsub.f32 %v436, %v500
        %v693 = vsub.f32 %v437, %v501
        %v694 = vsub.f32 %v438, %v502
        %v695 = vsub.f32 %v439, %v503
        %v696 = vsub.f32 %v440, %v504
        %v697 = vsub.f32 %v441, %v505
        %v698 = vsub.f32 %v442, %v506
        %v699 = vsub.f32 %v443, %v507
        %v700 = vsub.f32 %v444, %v508
        %v701 = vsub.f32 %v445, %v509
        %v702 = vsub.f32 %v446, %v510
        %v703 = vsub.f32 %v447, %v511
        %v704 = vsub.f32 %v448, %v512
        %v705 = vsub.f32 %v449, %v513
        %v706 = vlog2.pop %v578
        %v707 = vmul.f32 %v706, 0.6931472
        %v708 = vlog2.pop %v579
        %v709 = vmul.f32 %v708, 0.6931472
        %v710 = vlog2.pop %v580
        %v711 = vmul.f32 %v710, 0.6931472
        %v712 = vlog2.pop %v581
        %v713 = vmul.f32 %v712, 0.6931472
        %v714 = vlog2.pop %v582
        %v715 = vmul.f32 %v714, 0.6931472
        %v716 = vlog2.pop %v583
        %v717 = vmul.f32 %v716, 0.6931472
        %v718 = vlog2.pop %v584
        %v719 = vmul.f32 %v718, 0.6931472
        %v720 = vlog2.pop %v585
        %v721 = vmul.f32 %v720, 0.6931472
        %v722 = vlog2.pop %v586
        %v723 = vmul.f32 %v722, 0.6931472
        %v724 = vlog2.pop %v587
        %v725 = vmul.f32 %v724, 0.6931472
        %v726 = vlog2.pop %v588
        %v727 = vmul.f32 %v726, 0.6931472
        %v728 = vlog2.pop %v589
        %v729 = vmul.f32 %v728, 0.6931472
        %v730 = vlog2.pop %v590
        %v731 = vmul.f32 %v730, 0.6931472
        %v732 = vlog2.pop %v591
        %v733 = vmul.f32 %v732, 0.6931472
        %v734 = vlog2.pop %v592
        %v735 = vmul.f32 %v734, 0.6931472
        %v736 = vlog2.pop %v593
        %v737 = vmul.f32 %v736, 0.6931472
        %v738 = vlog2.pop %v594
        %v739 = vmul.f32 %v738, 0.6931472
        %v740 = vlog2.pop %v595
        %v741 = vmul.f32 %v740, 0.6931472
        %v742 = vlog2.pop %v596
        %v743 = vmul.f32 %v742, 0.6931472
        %v744 = vlog2.pop %v597
        %v745 = vmul.f32 %v744, 0.6931472
        %v746 = vlog2.pop %v598
        %v747 = vmul.f32 %v746, 0.6931472
        %v748 = vlog2.pop %v599
        %v749 = vmul.f32 %v748, 0.6931472
        %v750 = vlog2.pop %v600
        %v751 = vmul.f32 %v750, 0.6931472
        %v752 = vlog2.pop %v601
        %v753 = vmul.f32 %v752, 0.6931472
        %v754 = vlog2.pop %v602
        %v755 = vmul.f32 %v754, 0.6931472
        %v756 = vlog2.pop %v603
        %v757 = vmul.f32 %v756, 0.6931472
        %v758 = vlog2.pop %v604
        %v759 = vmul.f32 %v758, 0.6931472
        %v760 = vlog2.pop %v605
        %v761 = vmul.f32 %v760, 0.6931472
        %v762 = vlog2.pop %v606
        %v763 = vmul.f32 %v762, 0.6931472
        %v764 = vlog2.pop %v607
        %v765 = vmul.f32 %v764, 0.6931472
        %v766 = vlog2.pop %v608
        %v767 = vmul.f32 %v766, 0.6931472
        %v768 = vlog2.pop %v609
        %v769 = vmul.f32 %v768, 0.6931472
        %v770 = vlog2.pop %v610
        %v771 = vmul.f32 %v770, 0.6931472
        %v772 = vlog2.pop %v611
        %v773 = vmul.f32 %v772, 0.6931472
        %v774 = vlog2.pop %v612
        %v775 = vmul.f32 %v774, 0.6931472
        %v776 = vlog2.pop %v613
        %v777 = vmul.f32 %v776, 0.6931472
        %v778 = vlog2.pop %v614
        %v779 = vmul.f32 %v778, 0.6931472
        %v780 = vlog2.pop %v615
        %v781 = vmul.f32 %v780, 0.6931472
        %v782 = vlog2.pop %v616
        %v783 = vmul.f32 %v782, 0.6931472
        %v784 = vlog2.pop %v617
        %v785 = vmul.f32 %v784, 0.6931472
        %v786 = vlog2.pop %v618
        %v787 = vmul.f32 %v786, 0.6931472
        %v788 = vlog2.pop %v619
        %v789 = vmul.f32 %v788, 0.6931472
        %v790 = vlog2.pop %v620
        %v791 = vmul.f32 %v790, 0.6931472
        %v792 = vlog2.pop %v621
        %v793 = vmul.f32 %v792, 0.6931472
        %v794 = vlog2.pop %v622
        %v795 = vmul.f32 %v794, 0.6931472
        %v796 = vlog2.pop %v623
        %v797 = vmul.f32 %v796, 0.6931472
        %v798 = vlog2.pop %v624
        %v799 = vmul.f32 %v798, 0.6931472
        %v800 = vlog2.pop %v625
        %v801 = vmul.f32 %v800, 0.6931472
        %v802 = vlog2.pop %v626
        %v803 = vmul.f32 %v802, 0.6931472
        %v804 = vlog2.pop %v627
        %v805 = vmul.f32 %v804, 0.6931472
        %v806 = vlog2.pop %v628
        %v807 = vmul.f32 %v806, 0.6931472
        %v808 = vlog2.pop %v629
        %v809 = vmul.f32 %v808, 0.6931472
        %v810 = vlog2.pop %v630
        %v811 = vmul.f32 %v810, 0.6931472
        %v812 = vlog2.pop %v631
        %v813 = vmul.f32 %v812, 0.6931472
        %v814 = vlog2.pop %v632
        %v815 = vmul.f32 %v814, 0.6931472
        %v816 = vlog2.pop %v633
        %v817 = vmul.f32 %v816, 0.6931472
        %v818 = vlog2.pop %v634
        %v819 = vmul.f32 %v818, 0.6931472
        %v820 = vlog2.pop %v635
        %v821 = vmul.f32 %v820, 0.6931472
        %v822 = vlog2.pop %v636
        %v823 = vmul.f32 %v822, 0.6931472
        %v824 = vlog2.pop %v637
        %v825 = vmul.f32 %v824, 0.6931472
        %v826 = vlog2.pop %v638
        %v827 = vmul.f32 %v826, 0.6931472
        %v828 = vlog2.pop %v639
        %v829 = vmul.f32 %v828, 0.6931472
        %v830 = vlog2.pop %v640
        %v831 = vmul.f32 %v830, 0.6931472
        %v832 = vlog2.pop %v641
        %v833 = vmul.f32 %v832, 0.6931472
        %v834 = vmul.f32 %v642, %v642
        %v835 = vmul.f32 %v643, %v643
        %v836 = vmul.f32 %v644, %v644
        %v837 = vmul.f32 %v645, %v645
        %v838 = vmul.f32 %v646, %v646
        %v839 = vmul.f32 %v647, %v647
        %v840 = vmul.f32 %v648, %v648
        %v841 = vmul.f32 %v649, %v649
        %v842 = vmul.f32 %v650, %v650
        %v843 = vmul.f32 %v651, %v651
        %v844 = vmul.f32 %v652, %v652
        %v845 = vmul.f32 %v653, %v653
        %v846 = vmul.f32 %v654, %v654
        %v847 = vmul.f32 %v655, %v655
        %v848 = vmul.f32 %v656, %v656
        %v849 = vmul.f32 %v657, %v657
        %v850 = vmul.f32 %v658, %v658
        %v851 = vmul.f32 %v659, %v659
        %v852 = vmul.f32 %v660, %v660
        %v853 = vmul.f32 %v661, %v661
        %v854 = vmul.f32 %v662, %v662
        %v855 = vmul.f32 %v663, %v663
        %v856 = vmul.f32 %v664, %v664
        %v857 = vmul.f32 %v665, %v665
        %v858 = vmul.f32 %v666, %v666
        %v859 = vmul.f32 %v667, %v667
        %v860 = vmul.f32 %v668, %v668
        %v861 = vmul.f32 %v669, %v669
        %v862 = vmul.f32 %v670, %v670
        %v863 = vmul.f32 %v671, %v671
        %v864 = vmul.f32 %v672, %v672
        %v865 = vmul.f32 %v673, %v673
        %v866 = vmul.f32 %v674, %v674
        %v867 = vmul.f32 %v675, %v675
        %v868 = vmul.f32 %v676, %v676
        %v869 = vmul.f32 %v677, %v677
        %v870 = vmul.f32 %v678, %v678
        %v871 = vmul.f32 %v679, %v679
        %v872 = vmul.f32 %v680, %v680
        %v873 = vmul.f32 %v681, %v681
        %v874 = vmul.f32 %v682, %v682
        %v875 = vmul.f32 %v683, %v683
        %v876 = vmul.f32 %v684, %v684
        %v877 = vmul.f32 %v685, %v685
        %v878 = vmul.f32 %v686, %v686
        %v879 = vmul.f32 %v687, %v687
        %v880 = vmul.f32 %v688, %v688
        %v881 = vmul.f32 %v689, %v689
        %v882 = vmul.f32 %v690, %v690
        %v883 = vmul.f32 %v691, %v691
        %v884 = vmul.f32 %v692, %v692
        %v885 = vmul.f32 %v693, %v693
        %v886 = vmul.f32 %v694, %v694
        %v887 = vmul.f32 %v695, %v695
        %v888 = vmul.f32 %v696, %v696
        %v889 = vmul.f32 %v697, %v697
        %v890 = vmul.f32 %v698, %v698
        %v891 = vmul.f32 %v699, %v699
        %v892 = vmul.f32 %v700, %v700
        %v893 = vmul.f32 %v701, %v701
        %v894 = vmul.f32 %v702, %v702
        %v895 = vmul.f32 %v703, %v703
        %v896 = vmul.f32 %v704, %v704
        %v897 = vmul.f32 %v705, %v705
        %v898 = vrcp.pop %v578
        %v899 = vrcp.pop %v579
        %v900 = vrcp.pop %v580
        %v901 = vrcp.pop %v581
        %v902 = vrcp.pop %v582
        %v903 = vrcp.pop %v583
        %v904 = vrcp.pop %v584
        %v905 = vrcp.pop %v585
        %v906 = vrcp.pop %v586
        %v907 = vrcp.pop %v587
        %v908 = vrcp.pop %v588
        %v909 = vrcp.pop %v589
        %v910 = vrcp.pop %v590
        %v911 = vrcp.pop %v591
        %v912 = vrcp.pop %v592
        %v913 = vrcp.pop %v593
        %v914 = vrcp.pop %v594
        %v915 = vrcp.pop %v595
        %v916 = vrcp.pop %v596
        %v917 = vrcp.pop %v597
        %v918 = vrcp.pop %v598
        %v919 = vrcp.pop %v599
        %v920 = vrcp.pop %v600
        %v921 = vrcp.pop %v601
        %v922 = vrcp.pop %v602
        %v923 = vrcp.pop %v603
        %v924 = vrcp.pop %v604
        %v925 = vrcp.pop %v605
        %v926 = vrcp.pop %v606
        %v927 = vrcp.pop %v607
        %v928 = vrcp.pop %v608
        %v929 = vrcp.pop %v609
        %v930 = vrcp.pop %v610
        %v931 = vrcp.pop %v611
        %v932 = vrcp.pop %v612
        %v933 = vrcp.pop %v613
        %v934 = vrcp.pop %v614
        %v935 = vrcp.pop %v615
        %v936 = vrcp.pop %v616
        %v937 = vrcp.pop %v617
        %v938 = vrcp.pop %v618
        %v939 = vrcp.pop %v619
        %v940 = vrcp.pop %v620
        %v941 = vrcp.pop %v621
        %v942 = vrcp.pop %v622
        %v943 = vrcp.pop %v623
        %v944 = vrcp.pop %v624
        %v945 = vrcp.pop %v625
        %v946 = vrcp.pop %v626
        %v947 = vrcp.pop %v627
        %v948 = vrcp.pop %v628
        %v949 = vrcp.pop %v629
        %v950 = vrcp.pop %v630
        %v951 = vrcp.pop %v631
        %v952 = vrcp.pop %v632
        %v953 = vrcp.pop %v633
        %v954 = vrcp.pop %v634
        %v955 = vrcp.pop %v635
        %v956 = vrcp.pop %v636
        %v957 = vrcp.pop %v637
        %v958 = vrcp.pop %v638
        %v959 = vrcp.pop %v639
        %v960 = vrcp.pop %v640
        %v961 = vrcp.pop %v641
        %v962 = vmul.f32 %v834, %v898
        %v963 = vmul.f32 %v835, %v899
        %v964 = vmul.f32 %v836, %v900
        %v965 = vmul.f32 %v837, %v901
        %v966 = vmul.f32 %v838, %v902
        %v967 = vmul.f32 %v839, %v903
        %v968 = vmul.f32 %v840, %v904
        %v969 = vmul.f32 %v841, %v905
        %v970 = vmul.f32 %v842, %v906
        %v971 = vmul.f32 %v843, %v907
        %v972 = vmul.f32 %v844, %v908
        %v973 = vmul.f32 %v845, %v909
        %v974 = vmul.f32 %v846, %v910
        %v975 = vmul.f32 %v847, %v911
        %v976 = vmul.f32 %v848, %v912
        %v977 = vmul.f32 %v849, %v913
        %v978 = vmul.f32 %v850, %v914
        %v979 = vmul.f32 %v851, %v915
        %v980 = vmul.f32 %v852, %v916
        %v981 = vmul.f32 %v853, %v917
        %v982 = vmul.f32 %v854, %v918
        %v983 = vmul.f32 %v855, %v919
        %v984 = vmul.f32 %v856, %v920
        %v985 = vmul.f32 %v857, %v921
        %v986 = vmul.f32 %v858, %v922
        %v987 = vmul.f32 %v859, %v923
        %v988 = vmul.f32 %v860, %v924
        %v989 = vmul.f32 %v861, %v925
        %v990 = vmul.f32 %v862, %v926
        %v991 = vmul.f32 %v863, %v927
        %v992 = vmul.f32 %v864, %v928
        %v993 = vmul.f32 %v865, %v929
        %v994 = vmul.f32 %v866, %v930
        %v995 = vmul.f32 %v867, %v931
        %v996 = vmul.f32 %v868, %v932
        %v997 = vmul.f32 %v869, %v933
        %v998 = vmul.f32 %v870, %v934
        %v999 = vmul.f32 %v871, %v935
        %v1000 = vmul.f32 %v872, %v936
        %v1001 = vmul.f32 %v873, %v937
        %v1002 = vmul.f32 %v874, %v938
        %v1003 = vmul.f32 %v875, %v939
        %v1004 = vmul.f32 %v876, %v940
        %v1005 = vmul.f32 %v877, %v941
        %v1006 = vmul.f32 %v878, %v942
        %v1007 = vmul.f32 %v879, %v943
        %v1008 = vmul.f32 %v880, %v944
        %v1009 = vmul.f32 %v881, %v945
        %v1010 = vmul.f32 %v882, %v946
        %v1011 = vmul.f32 %v883, %v947
        %v1012 = vmul.f32 %v884, %v948
        %v1013 = vmul.f32 %v885, %v949
        %v1014 = vmul.f32 %v886, %v950
        %v1015 = vmul.f32 %v887, %v951
        %v1016 = vmul.f32 %v888, %v952
        %v1017 = vmul.f32 %v889, %v953
        %v1018 = vmul.f32 %v890, %v954
        %v1019 = vmul.f32 %v891, %v955
        %v1020 = vmul.f32 %v892, %v956
        %v1021 = vmul.f32 %v893, %v957
        %v1022 = vmul.f32 %v894, %v958
        %v1023 = vmul.f32 %v895, %v959
        %v1024 = vmul.f32 %v896, %v960
        %v1025 = vmul.f32 %v897, %v961
        %v1026 = vadd.f32 %v707, %v962
        %v1027 = vadd.f32 %v709, %v963
        %v1028 = vadd.f32 %v711, %v964
        %v1029 = vadd.f32 %v713, %v965
        %v1030 = vadd.f32 %v715, %v966
        %v1031 = vadd.f32 %v717, %v967
        %v1032 = vadd.f32 %v719, %v968
        %v1033 = vadd.f32 %v721, %v969
        %v1034 = vadd.f32 %v723, %v970
        %v1035 = vadd.f32 %v725, %v971
        %v1036 = vadd.f32 %v727, %v972
        %v1037 = vadd.f32 %v729, %v973
        %v1038 = vadd.f32 %v731, %v974
        %v1039 = vadd.f32 %v733, %v975
        %v1040 = vadd.f32 %v735, %v976
        %v1041 = vadd.f32 %v737, %v977
        %v1042 = vadd.f32 %v739, %v978
        %v1043 = vadd.f32 %v741, %v979
        %v1044 = vadd.f32 %v743, %v980
        %v1045 = vadd.f32 %v745, %v981
        %v1046 = vadd.f32 %v747, %v982
        %v1047 = vadd.f32 %v749, %v983
        %v1048 = vadd.f32 %v751, %v984
        %v1049 = vadd.f32 %v753, %v985
        %v1050 = vadd.f32 %v755, %v986
        %v1051 = vadd.f32 %v757, %v987
        %v1052 = vadd.f32 %v759, %v988
        %v1053 = vadd.f32 %v761, %v989
        %v1054 = vadd.f32 %v763, %v990
        %v1055 = vadd.f32 %v765, %v991
        %v1056 = vadd.f32 %v767, %v992
        %v1057 = vadd.f32 %v769, %v993
        %v1058 = vadd.f32 %v771, %v994
        %v1059 = vadd.f32 %v773, %v995
        %v1060 = vadd.f32 %v775, %v996
        %v1061 = vadd.f32 %v777, %v997
        %v1062 = vadd.f32 %v779, %v998
        %v1063 = vadd.f32 %v781, %v999
        %v1064 = vadd.f32 %v783, %v1000
        %v1065 = vadd.f32 %v785, %v1001
        %v1066 = vadd.f32 %v787, %v1002
        %v1067 = vadd.f32 %v789, %v1003
        %v1068 = vadd.f32 %v791, %v1004
        %v1069 = vadd.f32 %v793, %v1005
        %v1070 = vadd.f32 %v795, %v1006
        %v1071 = vadd.f32 %v797, %v1007
        %v1072 = vadd.f32 %v799, %v1008
        %v1073 = vadd.f32 %v801, %v1009
        %v1074 = vadd.f32 %v803, %v1010
        %v1075 = vadd.f32 %v805, %v1011
        %v1076 = vadd.f32 %v807, %v1012
        %v1077 = vadd.f32 %v809, %v1013
        %v1078 = vadd.f32 %v811, %v1014
        %v1079 = vadd.f32 %v813, %v1015
        %v1080 = vadd.f32 %v815, %v1016
        %v1081 = vadd.f32 %v817, %v1017
        %v1082 = vadd.f32 %v819, %v1018
        %v1083 = vadd.f32 %v821, %v1019
        %v1084 = vadd.f32 %v823, %v1020
        %v1085 = vadd.f32 %v825, %v1021
        %v1086 = vadd.f32 %v827, %v1022
        %v1087 = vadd.f32 %v829, %v1023
        %v1088 = vadd.f32 %v831, %v1024
        %v1089 = vadd.f32 %v833, %v1025
        %1090 = vadd.xlane.f32.xlu0 %v1026
        %v1091 = vpop.xlane.xlu0 %1090
        %1092 = vadd.xlane.f32.xlu0 %v1027
        %v1093 = vpop.xlane.xlu0 %1092
        %1094 = vadd.xlane.f32.xlu0 %v1028
        %v1095 = vpop.xlane.xlu0 %1094
        %1096 = vadd.xlane.f32.xlu0 %v1029
        %v1097 = vpop.xlane.xlu0 %1096
        %1098 = vadd.xlane.f32.xlu0 %v1030
        %v1099 = vpop.xlane.xlu0 %1098
        %1100 = vadd.xlane.f32.xlu0 %v1031
        %v1101 = vpop.xlane.xlu0 %1100
        %1102 = vadd.xlane.f32.xlu0 %v1032
        %v1103 = vpop.xlane.xlu0 %1102
        %1104 = vadd.xlane.f32.xlu0 %v1033
        %v1105 = vpop.xlane.xlu0 %1104
        %1106 = vadd.xlane.f32.xlu0 %v1034
        %v1107 = vpop.xlane.xlu0 %1106
        %1108 = vadd.xlane.f32.xlu0 %v1035
        %v1109 = vpop.xlane.xlu0 %1108
        %1110 = vadd.xlane.f32.xlu0 %v1036
        %v1111 = vpop.xlane.xlu0 %1110
        %1112 = vadd.xlane.f32.xlu0 %v1037
        %v1113 = vpop.xlane.xlu0 %1112
        %1114 = vadd.xlane.f32.xlu0 %v1038
        %v1115 = vpop.xlane.xlu0 %1114
        %1116 = vadd.xlane.f32.xlu0 %v1039
        %v1117 = vpop.xlane.xlu0 %1116
        %1118 = vadd.xlane.f32.xlu0 %v1040
        %v1119 = vpop.xlane.xlu0 %1118
        %1120 = vadd.xlane.f32.xlu0 %v1041
        %v1121 = vpop.xlane.xlu0 %1120
        %1122 = vadd.xlane.f32.xlu0 %v1042
        %v1123 = vpop.xlane.xlu0 %1122
        %1124 = vadd.xlane.f32.xlu0 %v1043
        %v1125 = vpop.xlane.xlu0 %1124
        %1126 = vadd.xlane.f32.xlu0 %v1044
        %v1127 = vpop.xlane.xlu0 %1126
        %1128 = vadd.xlane.f32.xlu0 %v1045
        %v1129 = vpop.xlane.xlu0 %1128
        %1130 = vadd.xlane.f32.xlu0 %v1046
        %v1131 = vpop.xlane.xlu0 %1130
        %1132 = vadd.xlane.f32.xlu0 %v1047
        %v1133 = vpop.xlane.xlu0 %1132
        %1134 = vadd.xlane.f32.xlu0 %v1048
        %v1135 = vpop.xlane.xlu0 %1134
        %1136 = vadd.xlane.f32.xlu0 %v1049
        %v1137 = vpop.xlane.xlu0 %1136
        %1138 = vadd.xlane.f32.xlu0 %v1050
        %v1139 = vpop.xlane.xlu0 %1138
        %1140 = vadd.xlane.f32.xlu0 %v1051
        %v1141 = vpop.xlane.xlu0 %1140
        %1142 = vadd.xlane.f32.xlu0 %v1052
        %v1143 = vpop.xlane.xlu0 %1142
        %1144 = vadd.xlane.f32.xlu0 %v1053
        %v1145 = vpop.xlane.xlu0 %1144
        %1146 = vadd.xlane.f32.xlu0 %v1054
        %v1147 = vpop.xlane.xlu0 %1146
        %1148 = vadd.xlane.f32.xlu0 %v1055
        %v1149 = vpop.xlane.xlu0 %1148
        %1150 = vadd.xlane.f32.xlu0 %v1056
        %v1151 = vpop.xlane.xlu0 %1150
        %1152 = vadd.xlane.f32.xlu0 %v1057
        %v1153 = vpop.xlane.xlu0 %1152
        %1154 = vadd.xlane.f32.xlu0 %v1058
        %v1155 = vpop.xlane.xlu0 %1154
        %1156 = vadd.xlane.f32.xlu0 %v1059
        %v1157 = vpop.xlane.xlu0 %1156
        %1158 = vadd.xlane.f32.xlu0 %v1060
        %v1159 = vpop.xlane.xlu0 %1158
        %1160 = vadd.xlane.f32.xlu0 %v1061
        %v1161 = vpop.xlane.xlu0 %1160
        %1162 = vadd.xlane.f32.xlu0 %v1062
        %v1163 = vpop.xlane.xlu0 %1162
        %1164 = vadd.xlane.f32.xlu0 %v1063
        %v1165 = vpop.xlane.xlu0 %1164
        %1166 = vadd.xlane.f32.xlu0 %v1064
        %v1167 = vpop.xlane.xlu0 %1166
        %1168 = vadd.xlane.f32.xlu0 %v1065
        %v1169 = vpop.xlane.xlu0 %1168
        %1170 = vadd.xlane.f32.xlu0 %v1066
        %v1171 = vpop.xlane.xlu0 %1170
        %1172 = vadd.xlane.f32.xlu0 %v1067
        %v1173 = vpop.xlane.xlu0 %1172
        %1174 = vadd.xlane.f32.xlu0 %v1068
        %v1175 = vpop.xlane.xlu0 %1174
        %1176 = vadd.xlane.f32.xlu0 %v1069
        %v1177 = vpop.xlane.xlu0 %1176
        %1178 = vadd.xlane.f32.xlu0 %v1070
        %v1179 = vpop.xlane.xlu0 %1178
        %1180 = vadd.xlane.f32.xlu0 %v1071
        %v1181 = vpop.xlane.xlu0 %1180
        %1182 = vadd.xlane.f32.xlu0 %v1072
        %v1183 = vpop.xlane.xlu0 %1182
        %1184 = vadd.xlane.f32.xlu0 %v1073
        %v1185 = vpop.xlane.xlu0 %1184
        %1186 = vadd.xlane.f32.xlu0 %v1074
        %v1187 = vpop.xlane.xlu0 %1186
        %1188 = vadd.xlane.f32.xlu0 %v1075
        %v1189 = vpop.xlane.xlu0 %1188
        %1190 = vadd.xlane.f32.xlu0 %v1076
        %v1191 = vpop.xlane.xlu0 %1190
        %1192 = vadd.xlane.f32.xlu0 %v1077
        %v1193 = vpop.xlane.xlu0 %1192
        %1194 = vadd.xlane.f32.xlu0 %v1078
        %v1195 = vpop.xlane.xlu0 %1194
        %1196 = vadd.xlane.f32.xlu0 %v1079
        %v1197 = vpop.xlane.xlu0 %1196
        %1198 = vadd.xlane.f32.xlu0 %v1080
        %v1199 = vpop.xlane.xlu0 %1198
        %1200 = vadd.xlane.f32.xlu0 %v1081
        %v1201 = vpop.xlane.xlu0 %1200
        %1202 = vadd.xlane.f32.xlu0 %v1082
        %v1203 = vpop.xlane.xlu0 %1202
        %1204 = vadd.xlane.f32.xlu0 %v1083
        %v1205 = vpop.xlane.xlu0 %1204
        %1206 = vadd.xlane.f32.xlu0 %v1084
        %v1207 = vpop.xlane.xlu0 %1206
        %1208 = vadd.xlane.f32.xlu0 %v1085
        %v1209 = vpop.xlane.xlu0 %1208
        %1210 = vadd.xlane.f32.xlu0 %v1086
        %v1211 = vpop.xlane.xlu0 %1210
        %1212 = vadd.xlane.f32.xlu0 %v1087
        %v1213 = vpop.xlane.xlu0 %1212
        %1214 = vadd.xlane.f32.xlu0 %v1088
        %v1215 = vpop.xlane.xlu0 %1214
        %1216 = vadd.xlane.f32.xlu0 %v1089
        %v1217 = vpop.xlane.xlu0 %1216
        %s1218 = sadd.s32 %s27, %s28
        %s1219 = smul.u32 %s1218, 512
        %v1220 = vlaneseq
        %v1221 = vshrl.u32 %v1220, 7
        %v1222 = vadd.s32 %v1221, 8
        %v1223 = vadd.s32 %v1221, 16
        %v1224 = vadd.s32 %v1221, 24
        %v1225 = vadd.s32 %v1221, 32
        %v1226 = vadd.s32 %v1221, 40
        %v1227 = vadd.s32 %v1221, 48
        %v1228 = vadd.s32 %v1221, 56
        %v1229 = vadd.s32 %v1221, 64
        %v1230 = vadd.s32 %v1221, 72
        %v1231 = vadd.s32 %v1221, 80
        %v1232 = vadd.s32 %v1221, 88
        %v1233 = vadd.s32 %v1221, 96
        %v1234 = vadd.s32 %v1221, 104
        %v1235 = vadd.s32 %v1221, 112
        %v1236 = vadd.s32 %v1221, 120
        %v1237 = vadd.s32 %v1221, 128
        %v1238 = vadd.s32 %v1221, 136
        %v1239 = vadd.s32 %v1221, 144
        %v1240 = vadd.s32 %v1221, 152
        %v1241 = vadd.s32 %v1221, 160
        %v1242 = vadd.s32 %v1221, 168
        %v1243 = vadd.s32 %v1221, 176
        %v1244 = vadd.s32 %v1221, 184
        %v1245 = vadd.s32 %v1221, 192
        %v1246 = vadd.s32 %v1221, 200
        %v1247 = vadd.s32 %v1221, 208
        %v1248 = vadd.s32 %v1221, 216
        %v1249 = vadd.s32 %v1221, 224
        %v1250 = vadd.s32 %v1221, 232
        %v1251 = vadd.s32 %v1221, 240
        %v1252 = vadd.s32 %v1221, 248
        %v1253 = vadd.s32 %v1221, 256
        %v1254 = vadd.s32 %v1221, 264
        %v1255 = vadd.s32 %v1221, 272
        %v1256 = vadd.s32 %v1221, 280
        %v1257 = vadd.s32 %v1221, 288
        %v1258 = vadd.s32 %v1221, 296
        %v1259 = vadd.s32 %v1221, 304
        %v1260 = vadd.s32 %v1221, 312
        %v1261 = vadd.s32 %v1221, 320
        %v1262 = vadd.s32 %v1221, 328
        %v1263 = vadd.s32 %v1221, 336
        %v1264 = vadd.s32 %v1221, 344
        %v1265 = vadd.s32 %v1221, 352
        %v1266 = vadd.s32 %v1221, 360
        %v1267 = vadd.s32 %v1221, 368
        %v1268 = vadd.s32 %v1221, 376
        %v1269 = vadd.s32 %v1221, 384
        %v1270 = vadd.s32 %v1221, 392
        %v1271 = vadd.s32 %v1221, 400
        %v1272 = vadd.s32 %v1221, 408
        %v1273 = vadd.s32 %v1221, 416
        %v1274 = vadd.s32 %v1221, 424
        %v1275 = vadd.s32 %v1221, 432
        %v1276 = vadd.s32 %v1221, 440
        %v1277 = vadd.s32 %v1221, 448
        %v1278 = vadd.s32 %v1221, 456
        %v1279 = vadd.s32 %v1221, 464
        %v1280 = vadd.s32 %v1221, 472
        %v1281 = vadd.s32 %v1221, 480
        %v1282 = vadd.s32 %v1221, 488
        %v1283 = vadd.s32 %v1221, 496
        %v1284 = vadd.s32 %v1221, 504
        %v1285 = vstv %s1219
        %v1286 = vadd.s32 %v1285, %v1221
        %v1287 = vadd.s32 %v1285, %v1222
        %v1288 = vadd.s32 %v1285, %v1223
        %v1289 = vadd.s32 %v1285, %v1224
        %v1290 = vadd.s32 %v1285, %v1225
        %v1291 = vadd.s32 %v1285, %v1226
        %v1292 = vadd.s32 %v1285, %v1227
        %v1293 = vadd.s32 %v1285, %v1228
        %v1294 = vadd.s32 %v1285, %v1229
        %v1295 = vadd.s32 %v1285, %v1230
        %v1296 = vadd.s32 %v1285, %v1231
        %v1297 = vadd.s32 %v1285, %v1232
        %v1298 = vadd.s32 %v1285, %v1233
        %v1299 = vadd.s32 %v1285, %v1234
        %v1300 = vadd.s32 %v1285, %v1235
        %v1301 = vadd.s32 %v1285, %v1236
        %v1302 = vadd.s32 %v1285, %v1237
        %v1303 = vadd.s32 %v1285, %v1238
        %v1304 = vadd.s32 %v1285, %v1239
        %v1305 = vadd.s32 %v1285, %v1240
        %v1306 = vadd.s32 %v1285, %v1241
        %v1307 = vadd.s32 %v1285, %v1242
        %v1308 = vadd.s32 %v1285, %v1243
        %v1309 = vadd.s32 %v1285, %v1244
        %v1310 = vadd.s32 %v1285, %v1245
        %v1311 = vadd.s32 %v1285, %v1246
        %v1312 = vadd.s32 %v1285, %v1247
        %v1313 = vadd.s32 %v1285, %v1248
        %v1314 = vadd.s32 %v1285, %v1249
        %v1315 = vadd.s32 %v1285, %v1250
        %v1316 = vadd.s32 %v1285, %v1251
        %v1317 = vadd.s32 %v1285, %v1252
        %v1318 = vadd.s32 %v1285, %v1253
        %v1319 = vadd.s32 %v1285, %v1254
        %v1320 = vadd.s32 %v1285, %v1255
        %v1321 = vadd.s32 %v1285, %v1256
        %v1322 = vadd.s32 %v1285, %v1257
        %v1323 = vadd.s32 %v1285, %v1258
        %v1324 = vadd.s32 %v1285, %v1259
        %v1325 = vadd.s32 %v1285, %v1260
        %v1326 = vadd.s32 %v1285, %v1261
        %v1327 = vadd.s32 %v1285, %v1262
        %v1328 = vadd.s32 %v1285, %v1263
        %v1329 = vadd.s32 %v1285, %v1264
        %v1330 = vadd.s32 %v1285, %v1265
        %v1331 = vadd.s32 %v1285, %v1266
        %v1332 = vadd.s32 %v1285, %v1267
        %v1333 = vadd.s32 %v1285, %v1268
        %v1334 = vadd.s32 %v1285, %v1269
        %v1335 = vadd.s32 %v1285, %v1270
        %v1336 = vadd.s32 %v1285, %v1271
        %v1337 = vadd.s32 %v1285, %v1272
        %v1338 = vadd.s32 %v1285, %v1273
        %v1339 = vadd.s32 %v1285, %v1274
        %v1340 = vadd.s32 %v1285, %v1275
        %v1341 = vadd.s32 %v1285, %v1276
        %v1342 = vadd.s32 %v1285, %v1277
        %v1343 = vadd.s32 %v1285, %v1278
        %v1344 = vadd.s32 %v1285, %v1279
        %v1345 = vadd.s32 %v1285, %v1280
        %v1346 = vadd.s32 %v1285, %v1281
        %v1347 = vadd.s32 %v1285, %v1282
        %v1348 = vadd.s32 %v1285, %v1283
        %v1349 = vadd.s32 %v1285, %v1284
        %vm1350 = vcmp.lt.s32.totalorder %v1286, 1024
        %vm1351 = vcmp.lt.s32.totalorder %v1287, 1024
        %vm1352 = vcmp.lt.s32.totalorder %v1288, 1024
        %vm1353 = vcmp.lt.s32.totalorder %v1289, 1024
        %vm1354 = vcmp.lt.s32.totalorder %v1290, 1024
        %vm1355 = vcmp.lt.s32.totalorder %v1291, 1024
        %vm1356 = vcmp.lt.s32.totalorder %v1292, 1024
        %vm1357 = vcmp.lt.s32.totalorder %v1293, 1024
        %vm1358 = vcmp.lt.s32.totalorder %v1294, 1024
        %vm1359 = vcmp.lt.s32.totalorder %v1295, 1024
        %vm1360 = vcmp.lt.s32.totalorder %v1296, 1024
        %vm1361 = vcmp.lt.s32.totalorder %v1297, 1024
        %vm1362 = vcmp.lt.s32.totalorder %v1298, 1024
        %vm1363 = vcmp.lt.s32.totalorder %v1299, 1024
        %vm1364 = vcmp.lt.s32.totalorder %v1300, 1024
        %vm1365 = vcmp.lt.s32.totalorder %v1301, 1024
        %vm1366 = vcmp.lt.s32.totalorder %v1302, 1024
        %vm1367 = vcmp.lt.s32.totalorder %v1303, 1024
        %vm1368 = vcmp.lt.s32.totalorder %v1304, 1024
        %vm1369 = vcmp.lt.s32.totalorder %v1305, 1024
        %vm1370 = vcmp.lt.s32.totalorder %v1306, 1024
        %vm1371 = vcmp.lt.s32.totalorder %v1307, 1024
        %vm1372 = vcmp.lt.s32.totalorder %v1308, 1024
        %vm1373 = vcmp.lt.s32.totalorder %v1309, 1024
        %vm1374 = vcmp.lt.s32.totalorder %v1310, 1024
        %vm1375 = vcmp.lt.s32.totalorder %v1311, 1024
        %vm1376 = vcmp.lt.s32.totalorder %v1312, 1024
        %vm1377 = vcmp.lt.s32.totalorder %v1313, 1024
        %vm1378 = vcmp.lt.s32.totalorder %v1314, 1024
        %vm1379 = vcmp.lt.s32.totalorder %v1315, 1024
        %vm1380 = vcmp.lt.s32.totalorder %v1316, 1024
        %vm1381 = vcmp.lt.s32.totalorder %v1317, 1024
        %vm1382 = vcmp.lt.s32.totalorder %v1318, 1024
        %vm1383 = vcmp.lt.s32.totalorder %v1319, 1024
        %vm1384 = vcmp.lt.s32.totalorder %v1320, 1024
        %vm1385 = vcmp.lt.s32.totalorder %v1321, 1024
        %vm1386 = vcmp.lt.s32.totalorder %v1322, 1024
        %vm1387 = vcmp.lt.s32.totalorder %v1323, 1024
        %vm1388 = vcmp.lt.s32.totalorder %v1324, 1024
        %vm1389 = vcmp.lt.s32.totalorder %v1325, 1024
        %vm1390 = vcmp.lt.s32.totalorder %v1326, 1024
        %vm1391 = vcmp.lt.s32.totalorder %v1327, 1024
        %vm1392 = vcmp.lt.s32.totalorder %v1328, 1024
        %vm1393 = vcmp.lt.s32.totalorder %v1329, 1024
        %vm1394 = vcmp.lt.s32.totalorder %v1330, 1024
        %vm1395 = vcmp.lt.s32.totalorder %v1331, 1024
        %vm1396 = vcmp.lt.s32.totalorder %v1332, 1024
        %vm1397 = vcmp.lt.s32.totalorder %v1333, 1024
        %vm1398 = vcmp.lt.s32.totalorder %v1334, 1024
        %vm1399 = vcmp.lt.s32.totalorder %v1335, 1024
        %vm1400 = vcmp.lt.s32.totalorder %v1336, 1024
        %vm1401 = vcmp.lt.s32.totalorder %v1337, 1024
        %vm1402 = vcmp.lt.s32.totalorder %v1338, 1024
        %vm1403 = vcmp.lt.s32.totalorder %v1339, 1024
        %vm1404 = vcmp.lt.s32.totalorder %v1340, 1024
        %vm1405 = vcmp.lt.s32.totalorder %v1341, 1024
        %vm1406 = vcmp.lt.s32.totalorder %v1342, 1024
        %vm1407 = vcmp.lt.s32.totalorder %v1343, 1024
        %vm1408 = vcmp.lt.s32.totalorder %v1344, 1024
        %vm1409 = vcmp.lt.s32.totalorder %v1345, 1024
        %vm1410 = vcmp.lt.s32.totalorder %v1346, 1024
        %vm1411 = vcmp.lt.s32.totalorder %v1347, 1024
        %vm1412 = vcmp.lt.s32.totalorder %v1348, 1024
        %vm1413 = vcmp.lt.s32.totalorder %v1349, 1024
        %v1414 = vsel %vm1350, %v1091, 0.0
        %v1415 = vsel %vm1351, %v1093, 0.0
        %v1416 = vsel %vm1352, %v1095, 0.0
        %v1417 = vsel %vm1353, %v1097, 0.0
        %v1418 = vsel %vm1354, %v1099, 0.0
        %v1419 = vsel %vm1355, %v1101, 0.0
        %v1420 = vsel %vm1356, %v1103, 0.0
        %v1421 = vsel %vm1357, %v1105, 0.0
        %v1422 = vsel %vm1358, %v1107, 0.0
        %v1423 = vsel %vm1359, %v1109, 0.0
        %v1424 = vsel %vm1360, %v1111, 0.0
        %v1425 = vsel %vm1361, %v1113, 0.0
        %v1426 = vsel %vm1362, %v1115, 0.0
        %v1427 = vsel %vm1363, %v1117, 0.0
        %v1428 = vsel %vm1364, %v1119, 0.0
        %v1429 = vsel %vm1365, %v1121, 0.0
        %v1430 = vsel %vm1366, %v1123, 0.0
        %v1431 = vsel %vm1367, %v1125, 0.0
        %v1432 = vsel %vm1368, %v1127, 0.0
        %v1433 = vsel %vm1369, %v1129, 0.0
        %v1434 = vsel %vm1370, %v1131, 0.0
        %v1435 = vsel %vm1371, %v1133, 0.0
        %v1436 = vsel %vm1372, %v1135, 0.0
        %v1437 = vsel %vm1373, %v1137, 0.0
        %v1438 = vsel %vm1374, %v1139, 0.0
        %v1439 = vsel %vm1375, %v1141, 0.0
        %v1440 = vsel %vm1376, %v1143, 0.0
        %v1441 = vsel %vm1377, %v1145, 0.0
        %v1442 = vsel %vm1378, %v1147, 0.0
        %v1443 = vsel %vm1379, %v1149, 0.0
        %v1444 = vsel %vm1380, %v1151, 0.0
        %v1445 = vsel %vm1381, %v1153, 0.0
        %v1446 = vsel %vm1382, %v1155, 0.0
        %v1447 = vsel %vm1383, %v1157, 0.0
        %v1448 = vsel %vm1384, %v1159, 0.0
        %v1449 = vsel %vm1385, %v1161, 0.0
        %v1450 = vsel %vm1386, %v1163, 0.0
        %v1451 = vsel %vm1387, %v1165, 0.0
        %v1452 = vsel %vm1388, %v1167, 0.0
        %v1453 = vsel %vm1389, %v1169, 0.0
        %v1454 = vsel %vm1390, %v1171, 0.0
        %v1455 = vsel %vm1391, %v1173, 0.0
        %v1456 = vsel %vm1392, %v1175, 0.0
        %v1457 = vsel %vm1393, %v1177, 0.0
        %v1458 = vsel %vm1394, %v1179, 0.0
        %v1459 = vsel %vm1395, %v1181, 0.0
        %v1460 = vsel %vm1396, %v1183, 0.0
        %v1461 = vsel %vm1397, %v1185, 0.0
        %v1462 = vsel %vm1398, %v1187, 0.0
        %v1463 = vsel %vm1399, %v1189, 0.0
        %v1464 = vsel %vm1400, %v1191, 0.0
        %v1465 = vsel %vm1401, %v1193, 0.0
        %v1466 = vsel %vm1402, %v1195, 0.0
        %v1467 = vsel %vm1403, %v1197, 0.0
        %v1468 = vsel %vm1404, %v1199, 0.0
        %v1469 = vsel %vm1405, %v1201, 0.0
        %v1470 = vsel %vm1406, %v1203, 0.0
        %v1471 = vsel %vm1407, %v1205, 0.0
        %v1472 = vsel %vm1408, %v1207, 0.0
        %v1473 = vsel %vm1409, %v1209, 0.0
        %v1474 = vsel %vm1410, %v1211, 0.0
        %v1475 = vsel %vm1411, %v1213, 0.0
        %v1476 = vsel %vm1412, %v1215, 0.0
        %v1477 = vsel %vm1413, %v1217, 0.0
        %v1478 = vld [vmem:[#allocation2] sm:$0xff]
        %v1479 = vld [vmem:[#allocation2 + $0x8] sm:$0xff]
        %v1480 = vld [vmem:[#allocation2 + $0x10] sm:$0xff]
        %v1481 = vld [vmem:[#allocation2 + $0x18] sm:$0xff]
        %v1482 = vld [vmem:[#allocation2 + $0x20] sm:$0xff]
        %v1483 = vld [vmem:[#allocation2 + $0x28] sm:$0xff]
        %v1484 = vld [vmem:[#allocation2 + $0x30] sm:$0xff]
        %v1485 = vld [vmem:[#allocation2 + $0x38] sm:$0xff]
        %v1486 = vld [vmem:[#allocation2 + $0x40] sm:$0xff]
        %v1487 = vld [vmem:[#allocation2 + $0x48] sm:$0xff]
        %v1488 = vld [vmem:[#allocation2 + $0x50] sm:$0xff]
        %v1489 = vld [vmem:[#allocation2 + $0x58] sm:$0xff]
        %v1490 = vld [vmem:[#allocation2 + $0x60] sm:$0xff]
        %v1491 = vld [vmem:[#allocation2 + $0x68] sm:$0xff]
        %v1492 = vld [vmem:[#allocation2 + $0x70] sm:$0xff]
        %v1493 = vld [vmem:[#allocation2 + $0x78] sm:$0xff]
        %v1494 = vld [vmem:[#allocation2 + $0x80] sm:$0xff]
        %v1495 = vld [vmem:[#allocation2 + $0x88] sm:$0xff]
        %v1496 = vld [vmem:[#allocation2 + $0x90] sm:$0xff]
        %v1497 = vld [vmem:[#allocation2 + $0x98] sm:$0xff]
        %v1498 = vld [vmem:[#allocation2 + $0xa0] sm:$0xff]
        %v1499 = vld [vmem:[#allocation2 + $0xa8] sm:$0xff]
        %v1500 = vld [vmem:[#allocation2 + $0xb0] sm:$0xff]
        %v1501 = vld [vmem:[#allocation2 + $0xb8] sm:$0xff]
        %v1502 = vld [vmem:[#allocation2 + $0xc0] sm:$0xff]
        %v1503 = vld [vmem:[#allocation2 + $0xc8] sm:$0xff]
        %v1504 = vld [vmem:[#allocation2 + $0xd0] sm:$0xff]
        %v1505 = vld [vmem:[#allocation2 + $0xd8] sm:$0xff]
        %v1506 = vld [vmem:[#allocation2 + $0xe0] sm:$0xff]
        %v1507 = vld [vmem:[#allocation2 + $0xe8] sm:$0xff]
        %v1508 = vld [vmem:[#allocation2 + $0xf0] sm:$0xff]
        %v1509 = vld [vmem:[#allocation2 + $0xf8] sm:$0xff]
        %v1510 = vld [vmem:[#allocation2 + $0x100] sm:$0xff]
        %v1511 = vld [vmem:[#allocation2 + $0x108] sm:$0xff]
        %v1512 = vld [vmem:[#allocation2 + $0x110] sm:$0xff]
        %v1513 = vld [vmem:[#allocation2 + $0x118] sm:$0xff]
        %v1514 = vld [vmem:[#allocation2 + $0x120] sm:$0xff]
        %v1515 = vld [vmem:[#allocation2 + $0x128] sm:$0xff]
        %v1516 = vld [vmem:[#allocation2 + $0x130] sm:$0xff]
        %v1517 = vld [vmem:[#allocation2 + $0x138] sm:$0xff]
        %v1518 = vld [vmem:[#allocation2 + $0x140] sm:$0xff]
        %v1519 = vld [vmem:[#allocation2 + $0x148] sm:$0xff]
        %v1520 = vld [vmem:[#allocation2 + $0x150] sm:$0xff]
        %v1521 = vld [vmem:[#allocation2 + $0x158] sm:$0xff]
        %v1522 = vld [vmem:[#allocation2 + $0x160] sm:$0xff]
        %v1523 = vld [vmem:[#allocation2 + $0x168] sm:$0xff]
        %v1524 = vld [vmem:[#allocation2 + $0x170] sm:$0xff]
        %v1525 = vld [vmem:[#allocation2 + $0x178] sm:$0xff]
        %v1526 = vld [vmem:[#allocation2 + $0x180] sm:$0xff]
        %v1527 = vld [vmem:[#allocation2 + $0x188] sm:$0xff]
        %v1528 = vld [vmem:[#allocation2 + $0x190] sm:$0xff]
        %v1529 = vld [vmem:[#allocation2 + $0x198] sm:$0xff]
        %v1530 = vld [vmem:[#allocation2 + $0x1a0] sm:$0xff]
        %v1531 = vld [vmem:[#allocation2 + $0x1a8] sm:$0xff]
        %v1532 = vld [vmem:[#allocation2 + $0x1b0] sm:$0xff]
        %v1533 = vld [vmem:[#allocation2 + $0x1b8] sm:$0xff]
        %v1534 = vld [vmem:[#allocation2 + $0x1c0] sm:$0xff]
        %v1535 = vld [vmem:[#allocation2 + $0x1c8] sm:$0xff]
        %v1536 = vld [vmem:[#allocation2 + $0x1d0] sm:$0xff]
        %v1537 = vld [vmem:[#allocation2 + $0x1d8] sm:$0xff]
        %v1538 = vld [vmem:[#allocation2 + $0x1e0] sm:$0xff]
        %v1539 = vld [vmem:[#allocation2 + $0x1e8] sm:$0xff]
        %v1540 = vld [vmem:[#allocation2 + $0x1f0] sm:$0xff]
        %v1541 = vld [vmem:[#allocation2 + $0x1f8] sm:$0xff]
        %v1542 = vadd.f32 %v1478, %v1414
        %v1543 = vadd.f32 %v1479, %v1415
        %v1544 = vadd.f32 %v1480, %v1416
        %v1545 = vadd.f32 %v1481, %v1417
        %v1546 = vadd.f32 %v1482, %v1418
        %v1547 = vadd.f32 %v1483, %v1419
        %v1548 = vadd.f32 %v1484, %v1420
        %v1549 = vadd.f32 %v1485, %v1421
        %v1550 = vadd.f32 %v1486, %v1422
        %v1551 = vadd.f32 %v1487, %v1423
        %v1552 = vadd.f32 %v1488, %v1424
        %v1553 = vadd.f32 %v1489, %v1425
        %v1554 = vadd.f32 %v1490, %v1426
        %v1555 = vadd.f32 %v1491, %v1427
        %v1556 = vadd.f32 %v1492, %v1428
        %v1557 = vadd.f32 %v1493, %v1429
        %v1558 = vadd.f32 %v1494, %v1430
        %v1559 = vadd.f32 %v1495, %v1431
        %v1560 = vadd.f32 %v1496, %v1432
        %v1561 = vadd.f32 %v1497, %v1433
        %v1562 = vadd.f32 %v1498, %v1434
        %v1563 = vadd.f32 %v1499, %v1435
        %v1564 = vadd.f32 %v1500, %v1436
        %v1565 = vadd.f32 %v1501, %v1437
        %v1566 = vadd.f32 %v1502, %v1438
        %v1567 = vadd.f32 %v1503, %v1439
        %v1568 = vadd.f32 %v1504, %v1440
        %v1569 = vadd.f32 %v1505, %v1441
        %v1570 = vadd.f32 %v1506, %v1442
        %v1571 = vadd.f32 %v1507, %v1443
        %v1572 = vadd.f32 %v1508, %v1444
        %v1573 = vadd.f32 %v1509, %v1445
        %v1574 = vadd.f32 %v1510, %v1446
        %v1575 = vadd.f32 %v1511, %v1447
        %v1576 = vadd.f32 %v1512, %v1448
        %v1577 = vadd.f32 %v1513, %v1449
        %v1578 = vadd.f32 %v1514, %v1450
        %v1579 = vadd.f32 %v1515, %v1451
        %v1580 = vadd.f32 %v1516, %v1452
        %v1581 = vadd.f32 %v1517, %v1453
        %v1582 = vadd.f32 %v1518, %v1454
        %v1583 = vadd.f32 %v1519, %v1455
        %v1584 = vadd.f32 %v1520, %v1456
        %v1585 = vadd.f32 %v1521, %v1457
        %v1586 = vadd.f32 %v1522, %v1458
        %v1587 = vadd.f32 %v1523, %v1459
        %v1588 = vadd.f32 %v1524, %v1460
        %v1589 = vadd.f32 %v1525, %v1461
        %v1590 = vadd.f32 %v1526, %v1462
        %v1591 = vadd.f32 %v1527, %v1463
        %v1592 = vadd.f32 %v1528, %v1464
        %v1593 = vadd.f32 %v1529, %v1465
        %v1594 = vadd.f32 %v1530, %v1466
        %v1595 = vadd.f32 %v1531, %v1467
        %v1596 = vadd.f32 %v1532, %v1468
        %v1597 = vadd.f32 %v1533, %v1469
        %v1598 = vadd.f32 %v1534, %v1470
        %v1599 = vadd.f32 %v1535, %v1471
        %v1600 = vadd.f32 %v1536, %v1472
        %v1601 = vadd.f32 %v1537, %v1473
        %v1602 = vadd.f32 %v1538, %v1474
        %v1603 = vadd.f32 %v1539, %v1475
        %v1604 = vadd.f32 %v1540, %v1476
        %v1605 = vadd.f32 %v1541, %v1477
        %vm1606 = vcmask 7168
        %1607 = vst.msk [vmem:[#allocation2] sm:$0xff] %vm1606, %v1542
        %1608 = vst.msk [vmem:[#allocation2 + $0x8] sm:$0xff] %vm1606, %v1543
        %1609 = vst.msk [vmem:[#allocation2 + $0x10] sm:$0xff] %vm1606, %v1544
        %1610 = vst.msk [vmem:[#allocation2 + $0x18] sm:$0xff] %vm1606, %v1545
        %1611 = vst.msk [vmem:[#allocation2 + $0x20] sm:$0xff] %vm1606, %v1546
        %1612 = vst.msk [vmem:[#allocation2 + $0x28] sm:$0xff] %vm1606, %v1547
        %1613 = vst.msk [vmem:[#allocation2 + $0x30] sm:$0xff] %vm1606, %v1548
        %1614 = vst.msk [vmem:[#allocation2 + $0x38] sm:$0xff] %vm1606, %v1549
        %1615 = vst.msk [vmem:[#allocation2 + $0x40] sm:$0xff] %vm1606, %v1550
        %1616 = vst.msk [vmem:[#allocation2 + $0x48] sm:$0xff] %vm1606, %v1551
        %1617 = vst.msk [vmem:[#allocation2 + $0x50] sm:$0xff] %vm1606, %v1552
        %1618 = vst.msk [vmem:[#allocation2 + $0x58] sm:$0xff] %vm1606, %v1553
        %1619 = vst.msk [vmem:[#allocation2 + $0x60] sm:$0xff] %vm1606, %v1554
        %1620 = vst.msk [vmem:[#allocation2 + $0x68] sm:$0xff] %vm1606, %v1555
        %1621 = vst.msk [vmem:[#allocation2 + $0x70] sm:$0xff] %vm1606, %v1556
        %1622 = vst.msk [vmem:[#allocation2 + $0x78] sm:$0xff] %vm1606, %v1557
        %1623 = vst.msk [vmem:[#allocation2 + $0x80] sm:$0xff] %vm1606, %v1558
        %1624 = vst.msk [vmem:[#allocation2 + $0x88] sm:$0xff] %vm1606, %v1559
        %1625 = vst.msk [vmem:[#allocation2 + $0x90] sm:$0xff] %vm1606, %v1560
        %1626 = vst.msk [vmem:[#allocation2 + $0x98] sm:$0xff] %vm1606, %v1561
        %1627 = vst.msk [vmem:[#allocation2 + $0xa0] sm:$0xff] %vm1606, %v1562
        %1628 = vst.msk [vmem:[#allocation2 + $0xa8] sm:$0xff] %vm1606, %v1563
        %1629 = vst.msk [vmem:[#allocation2 + $0xb0] sm:$0xff] %vm1606, %v1564
        %1630 = vst.msk [vmem:[#allocation2 + $0xb8] sm:$0xff] %vm1606, %v1565
        %1631 = vst.msk [vmem:[#allocation2 + $0xc0] sm:$0xff] %vm1606, %v1566
        %1632 = vst.msk [vmem:[#allocation2 + $0xc8] sm:$0xff] %vm1606, %v1567
        %1633 = vst.msk [vmem:[#allocation2 + $0xd0] sm:$0xff] %vm1606, %v1568
        %1634 = vst.msk [vmem:[#allocation2 + $0xd8] sm:$0xff] %vm1606, %v1569
        %1635 = vst.msk [vmem:[#allocation2 + $0xe0] sm:$0xff] %vm1606, %v1570
        %1636 = vst.msk [vmem:[#allocation2 + $0xe8] sm:$0xff] %vm1606, %v1571
        %1637 = vst.msk [vmem:[#allocation2 + $0xf0] sm:$0xff] %vm1606, %v1572
        %1638 = vst.msk [vmem:[#allocation2 + $0xf8] sm:$0xff] %vm1606, %v1573
        %1639 = vst.msk [vmem:[#allocation2 + $0x100] sm:$0xff] %vm1606, %v1574
        %1640 = vst.msk [vmem:[#allocation2 + $0x108] sm:$0xff] %vm1606, %v1575
        %1641 = vst.msk [vmem:[#allocation2 + $0x110] sm:$0xff] %vm1606, %v1576
        %1642 = vst.msk [vmem:[#allocation2 + $0x118] sm:$0xff] %vm1606, %v1577
        %1643 = vst.msk [vmem:[#allocation2 + $0x120] sm:$0xff] %vm1606, %v1578
        %1644 = vst.msk [vmem:[#allocation2 + $0x128] sm:$0xff] %vm1606, %v1579
        %1645 = vst.msk [vmem:[#allocation2 + $0x130] sm:$0xff] %vm1606, %v1580
        %1646 = vst.msk [vmem:[#allocation2 + $0x138] sm:$0xff] %vm1606, %v1581
        %1647 = vst.msk [vmem:[#allocation2 + $0x140] sm:$0xff] %vm1606, %v1582
        %1648 = vst.msk [vmem:[#allocation2 + $0x148] sm:$0xff] %vm1606, %v1583
        %1649 = vst.msk [vmem:[#allocation2 + $0x150] sm:$0xff] %vm1606, %v1584
        %1650 = vst.msk [vmem:[#allocation2 + $0x158] sm:$0xff] %vm1606, %v1585
        %1651 = vst.msk [vmem:[#allocation2 + $0x160] sm:$0xff] %vm1606, %v1586
        %1652 = vst.msk [vmem:[#allocation2 + $0x168] sm:$0xff] %vm1606, %v1587
        %1653 = vst.msk [vmem:[#allocation2 + $0x170] sm:$0xff] %vm1606, %v1588
        %1654 = vst.msk [vmem:[#allocation2 + $0x178] sm:$0xff] %vm1606, %v1589
        %1655 = vst.msk [vmem:[#allocation2 + $0x180] sm:$0xff] %vm1606, %v1590
        %1656 = vst.msk [vmem:[#allocation2 + $0x188] sm:$0xff] %vm1606, %v1591
        %1657 = vst.msk [vmem:[#allocation2 + $0x190] sm:$0xff] %vm1606, %v1592
        %1658 = vst.msk [vmem:[#allocation2 + $0x198] sm:$0xff] %vm1606, %v1593
        %1659 = vst.msk [vmem:[#allocation2 + $0x1a0] sm:$0xff] %vm1606, %v1594
        %1660 = vst.msk [vmem:[#allocation2 + $0x1a8] sm:$0xff] %vm1606, %v1595
        %1661 = vst.msk [vmem:[#allocation2 + $0x1b0] sm:$0xff] %vm1606, %v1596
        %1662 = vst.msk [vmem:[#allocation2 + $0x1b8] sm:$0xff] %vm1606, %v1597
        %1663 = vst.msk [vmem:[#allocation2 + $0x1c0] sm:$0xff] %vm1606, %v1598
        %1664 = vst.msk [vmem:[#allocation2 + $0x1c8] sm:$0xff] %vm1606, %v1599
        %1665 = vst.msk [vmem:[#allocation2 + $0x1d0] sm:$0xff] %vm1606, %v1600
        %1666 = vst.msk [vmem:[#allocation2 + $0x1d8] sm:$0xff] %vm1606, %v1601
        %1667 = vst.msk [vmem:[#allocation2 + $0x1e0] sm:$0xff] %vm1606, %v1602
        %1668 = vst.msk [vmem:[#allocation2 + $0x1e8] sm:$0xff] %vm1606, %v1603
        %1669 = vst.msk [vmem:[#allocation2 + $0x1f0] sm:$0xff] %vm1606, %v1604
        %1670 = vst.msk [vmem:[#allocation2 + $0x1f8] sm:$0xff] %vm1606, %v1605
        // Predicated region
        $region49: #{tpu_custom_call.1} parent=31 // pred_check
          %p1671 = pneg %p317
        $region50: #{tpu_custom_call.1} parent=31 // pred_check_branch
          %1673 = sbr.rel (%p1671) target = $region52
        $region51: #{tpu_custom_call.1} parent=31 // pred_region
          %v1674 = vld [vmem:[#allocation2] sm:$0xff]
          %v1675 = vld [vmem:[#allocation2 + $0x8] sm:$0xff]
          %v1676 = vld [vmem:[#allocation2 + $0x10] sm:$0xff]
          %v1677 = vld [vmem:[#allocation2 + $0x18] sm:$0xff]
          %v1678 = vld [vmem:[#allocation2 + $0x20] sm:$0xff]
          %v1679 = vld [vmem:[#allocation2 + $0x28] sm:$0xff]
          %v1680 = vld [vmem:[#allocation2 + $0x30] sm:$0xff]
          %v1681 = vld [vmem:[#allocation2 + $0x38] sm:$0xff]
          %v1682 = vld [vmem:[#allocation2 + $0x40] sm:$0xff]
          %v1683 = vld [vmem:[#allocation2 + $0x48] sm:$0xff]
          %v1684 = vld [vmem:[#allocation2 + $0x50] sm:$0xff]
          %v1685 = vld [vmem:[#allocation2 + $0x58] sm:$0xff]
          %v1686 = vld [vmem:[#allocation2 + $0x60] sm:$0xff]
          %v1687 = vld [vmem:[#allocation2 + $0x68] sm:$0xff]
          %v1688 = vld [vmem:[#allocation2 + $0x70] sm:$0xff]
          %v1689 = vld [vmem:[#allocation2 + $0x78] sm:$0xff]
          %v1690 = vld [vmem:[#allocation2 + $0x80] sm:$0xff]
          %v1691 = vld [vmem:[#allocation2 + $0x88] sm:$0xff]
          %v1692 = vld [vmem:[#allocation2 + $0x90] sm:$0xff]
          %v1693 = vld [vmem:[#allocation2 + $0x98] sm:$0xff]
          %v1694 = vld [vmem:[#allocation2 + $0xa0] sm:$0xff]
          %v1695 = vld [vmem:[#allocation2 + $0xa8] sm:$0xff]
          %v1696 = vld [vmem:[#allocation2 + $0xb0] sm:$0xff]
          %v1697 = vld [vmem:[#allocation2 + $0xb8] sm:$0xff]
          %v1698 = vld [vmem:[#allocation2 + $0xc0] sm:$0xff]
          %v1699 = vld [vmem:[#allocation2 + $0xc8] sm:$0xff]
          %v1700 = vld [vmem:[#allocation2 + $0xd0] sm:$0xff]
          %v1701 = vld [vmem:[#allocation2 + $0xd8] sm:$0xff]
          %v1702 = vld [vmem:[#allocation2 + $0xe0] sm:$0xff]
          %v1703 = vld [vmem:[#allocation2 + $0xe8] sm:$0xff]
          %v1704 = vld [vmem:[#allocation2 + $0xf0] sm:$0xff]
          %v1705 = vld [vmem:[#allocation2 + $0xf8] sm:$0xff]
          %v1706 = vld [vmem:[#allocation2 + $0x100] sm:$0xff]
          %v1707 = vld [vmem:[#allocation2 + $0x108] sm:$0xff]
          %v1708 = vld [vmem:[#allocation2 + $0x110] sm:$0xff]
          %v1709 = vld [vmem:[#allocation2 + $0x118] sm:$0xff]
          %v1710 = vld [vmem:[#allocation2 + $0x120] sm:$0xff]
          %v1711 = vld [vmem:[#allocation2 + $0x128] sm:$0xff]
          %v1712 = vld [vmem:[#allocation2 + $0x130] sm:$0xff]
          %v1713 = vld [vmem:[#allocation2 + $0x138] sm:$0xff]
          %v1714 = vld [vmem:[#allocation2 + $0x140] sm:$0xff]
          %v1715 = vld [vmem:[#allocation2 + $0x148] sm:$0xff]
          %v1716 = vld [vmem:[#allocation2 + $0x150] sm:$0xff]
          %v1717 = vld [vmem:[#allocation2 + $0x158] sm:$0xff]
          %v1718 = vld [vmem:[#allocation2 + $0x160] sm:$0xff]
          %v1719 = vld [vmem:[#allocation2 + $0x168] sm:$0xff]
          %v1720 = vld [vmem:[#allocation2 + $0x170] sm:$0xff]
          %v1721 = vld [vmem:[#allocation2 + $0x178] sm:$0xff]
          %v1722 = vld [vmem:[#allocation2 + $0x180] sm:$0xff]
          %v1723 = vld [vmem:[#allocation2 + $0x188] sm:$0xff]
          %v1724 = vld [vmem:[#allocation2 + $0x190] sm:$0xff]
          %v1725 = vld [vmem:[#allocation2 + $0x198] sm:$0xff]
          %v1726 = vld [vmem:[#allocation2 + $0x1a0] sm:$0xff]
          %v1727 = vld [vmem:[#allocation2 + $0x1a8] sm:$0xff]
          %v1728 = vld [vmem:[#allocation2 + $0x1b0] sm:$0xff]
          %v1729 = vld [vmem:[#allocation2 + $0x1b8] sm:$0xff]
          %v1730 = vld [vmem:[#allocation2 + $0x1c0] sm:$0xff]
          %v1731 = vld [vmem:[#allocation2 + $0x1c8] sm:$0xff]
          %v1732 = vld [vmem:[#allocation2 + $0x1d0] sm:$0xff]
          %v1733 = vld [vmem:[#allocation2 + $0x1d8] sm:$0xff]
          %v1734 = vld [vmem:[#allocation2 + $0x1e0] sm:$0xff]
          %v1735 = vld [vmem:[#allocation2 + $0x1e8] sm:$0xff]
          %v1736 = vld [vmem:[#allocation2 + $0x1f0] sm:$0xff]
          %v1737 = vld [vmem:[#allocation2 + $0x1f8] sm:$0xff]
          %v1738 = vsel %vm1606, %v1674, 0.0
          %v1739 = vsel %vm1606, %v1675, 0.0
          %v1740 = vadd.f32 %v1738, %v1739
          %v1741 = vsel %vm1606, %v1676, 0.0
          %v1742 = vadd.f32 %v1740, %v1741
          %v1743 = vsel %vm1606, %v1677, 0.0
          %v1744 = vadd.f32 %v1742, %v1743
          %v1745 = vsel %vm1606, %v1678, 0.0
          %v1746 = vadd.f32 %v1744, %v1745
          %v1747 = vsel %vm1606, %v1679, 0.0
          %v1748 = vadd.f32 %v1746, %v1747
          %v1749 = vsel %vm1606, %v1680, 0.0
          %v1750 = vadd.f32 %v1748, %v1749
          %v1751 = vsel %vm1606, %v1681, 0.0
          %v1752 = vadd.f32 %v1750, %v1751
          %v1753 = vsel %vm1606, %v1682, 0.0
          %v1754 = vadd.f32 %v1752, %v1753
          %v1755 = vsel %vm1606, %v1683, 0.0
          %v1756 = vadd.f32 %v1754, %v1755
          %v1757 = vsel %vm1606, %v1684, 0.0
          %v1758 = vadd.f32 %v1756, %v1757
          %v1759 = vsel %vm1606, %v1685, 0.0
          %v1760 = vadd.f32 %v1758, %v1759
          %v1761 = vsel %vm1606, %v1686, 0.0
          %v1762 = vadd.f32 %v1760, %v1761
          %v1763 = vsel %vm1606, %v1687, 0.0
          %v1764 = vadd.f32 %v1762, %v1763
          %v1765 = vsel %vm1606, %v1688, 0.0
          %v1766 = vadd.f32 %v1764, %v1765
          %v1767 = vsel %vm1606, %v1689, 0.0
          %v1768 = vadd.f32 %v1766, %v1767
          %v1769 = vsel %vm1606, %v1690, 0.0
          %v1770 = vadd.f32 %v1768, %v1769
          %v1771 = vsel %vm1606, %v1691, 0.0
          %v1772 = vadd.f32 %v1770, %v1771
          %v1773 = vsel %vm1606, %v1692, 0.0
          %v1774 = vadd.f32 %v1772, %v1773
          %v1775 = vsel %vm1606, %v1693, 0.0
          %v1776 = vadd.f32 %v1774, %v1775
          %v1777 = vsel %vm1606, %v1694, 0.0
          %v1778 = vadd.f32 %v1776, %v1777
          %v1779 = vsel %vm1606, %v1695, 0.0
          %v1780 = vadd.f32 %v1778, %v1779
          %v1781 = vsel %vm1606, %v1696, 0.0
          %v1782 = vadd.f32 %v1780, %v1781
          %v1783 = vsel %vm1606, %v1697, 0.0
          %v1784 = vadd.f32 %v1782, %v1783
          %v1785 = vsel %vm1606, %v1698, 0.0
          %v1786 = vadd.f32 %v1784, %v1785
          %v1787 = vsel %vm1606, %v1699, 0.0
          %v1788 = vadd.f32 %v1786, %v1787
          %v1789 = vsel %vm1606, %v1700, 0.0
          %v1790 = vadd.f32 %v1788, %v1789
          %v1791 = vsel %vm1606, %v1701, 0.0
          %v1792 = vadd.f32 %v1790, %v1791
          %v1793 = vsel %vm1606, %v1702, 0.0
          %v1794 = vadd.f32 %v1792, %v1793
          %v1795 = vsel %vm1606, %v1703, 0.0
          %v1796 = vadd.f32 %v1794, %v1795
          %v1797 = vsel %vm1606, %v1704, 0.0
          %v1798 = vadd.f32 %v1796, %v1797
          %v1799 = vsel %vm1606, %v1705, 0.0
          %v1800 = vadd.f32 %v1798, %v1799
          %v1801 = vsel %vm1606, %v1706, 0.0
          %v1802 = vadd.f32 %v1800, %v1801
          %v1803 = vsel %vm1606, %v1707, 0.0
          %v1804 = vadd.f32 %v1802, %v1803
          %v1805 = vsel %vm1606, %v1708, 0.0
          %v1806 = vadd.f32 %v1804, %v1805
          %v1807 = vsel %vm1606, %v1709, 0.0
          %v1808 = vadd.f32 %v1806, %v1807
          %v1809 = vsel %vm1606, %v1710, 0.0
          %v1810 = vadd.f32 %v1808, %v1809
          %v1811 = vsel %vm1606, %v1711, 0.0
          %v1812 = vadd.f32 %v1810, %v1811
          %v1813 = vsel %vm1606, %v1712, 0.0
          %v1814 = vadd.f32 %v1812, %v1813
          %v1815 = vsel %vm1606, %v1713, 0.0
          %v1816 = vadd.f32 %v1814, %v1815
          %v1817 = vsel %vm1606, %v1714, 0.0
          %v1818 = vadd.f32 %v1816, %v1817
          %v1819 = vsel %vm1606, %v1715, 0.0
          %v1820 = vadd.f32 %v1818, %v1819
          %v1821 = vsel %vm1606, %v1716, 0.0
          %v1822 = vadd.f32 %v1820, %v1821
          %v1823 = vsel %vm1606, %v1717, 0.0
          %v1824 = vadd.f32 %v1822, %v1823
          %v1825 = vsel %vm1606, %v1718, 0.0
          %v1826 = vadd.f32 %v1824, %v1825
          %v1827 = vsel %vm1606, %v1719, 0.0
          %v1828 = vadd.f32 %v1826, %v1827
          %v1829 = vsel %vm1606, %v1720, 0.0
          %v1830 = vadd.f32 %v1828, %v1829
          %v1831 = vsel %vm1606, %v1721, 0.0
          %v1832 = vadd.f32 %v1830, %v1831
          %v1833 = vsel %vm1606, %v1722, 0.0
          %v1834 = vadd.f32 %v1832, %v1833
          %v1835 = vsel %vm1606, %v1723, 0.0
          %v1836 = vadd.f32 %v1834, %v1835
          %v1837 = vsel %vm1606, %v1724, 0.0
          %v1838 = vadd.f32 %v1836, %v1837
          %v1839 = vsel %vm1606, %v1725, 0.0
          %v1840 = vadd.f32 %v1838, %v1839
          %v1841 = vsel %vm1606, %v1726, 0.0
          %v1842 = vadd.f32 %v1840, %v1841
          %v1843 = vsel %vm1606, %v1727, 0.0
          %v1844 = vadd.f32 %v1842, %v1843
          %v1845 = vsel %vm1606, %v1728, 0.0
          %v1846 = vadd.f32 %v1844, %v1845
          %v1847 = vsel %vm1606, %v1729, 0.0
          %v1848 = vadd.f32 %v1846, %v1847
          %v1849 = vsel %vm1606, %v1730, 0.0
          %v1850 = vadd.f32 %v1848, %v1849
          %v1851 = vsel %vm1606, %v1731, 0.0
          %v1852 = vadd.f32 %v1850, %v1851
          %v1853 = vsel %vm1606, %v1732, 0.0
          %v1854 = vadd.f32 %v1852, %v1853
          %v1855 = vsel %vm1606, %v1733, 0.0
          %v1856 = vadd.f32 %v1854, %v1855
          %v1857 = vsel %vm1606, %v1734, 0.0
          %v1858 = vadd.f32 %v1856, %v1857
          %v1859 = vsel %vm1606, %v1735, 0.0
          %v1860 = vadd.f32 %v1858, %v1859
          %v1861 = vsel %vm1606, %v1736, 0.0
          %v1862 = vadd.f32 %v1860, %v1861
          %v1863 = vsel %vm1606, %v1737, 0.0
          %v1864 = vadd.f32 %v1862, %v1863
          %1865 = vadd.xlane.f32.xlu0 %v1864
          %v1866 = vpop.xlane.xlu0 %1865
          %v1867 = vrot.slane %v1866, 4
          %v1868 = vadd.f32 %v1866, %v1867
          %v1869 = vrot.slane %v1868, 2
          %v1870 = vadd.f32 %v1868, %v1869
          %v1871 = vrot.slane %v1870, 1
          %v1872 = vadd.f32 %v1870, %v1871
          %s1873 = vtos %v1872
          %v1874 = vstv %s1873
          %1875 = vst [vmem:[%s304] sm:$0xff] %v1874
        $region52: #{tpu_custom_call.1} parent=31 // pred_fallthru
          _
        %s1876 = sand.u32 %s139, 1
        %s1877 = scalar_lea.sflag [#allocation5], %s1876
        %s1878 = sand.u32 %s139, 1
        %s1879 = smul.addr %s1878, 8
        %s1880 = scalar_lea.vmem [#allocation9], %s1879
        // Predicated region
        $region53: #{tpu_custom_call.1} parent=31 // pred_check
          %p1881 = pneg %p149
        $region54: #{tpu_custom_call.1} parent=31 // pred_check_branch
          %1883 = sbr.rel (%p1881) target = $region56
        $region55: #{tpu_custom_call.1} parent=31 // pred_region
          %s1885 = ssub.s32 128, 128
          %1886 = vsyncadd %s1877, %s1885
          %s1887 = smul.addr %s27, 128
          %s1888 = scalar_lea.hbm %s3, %s1887
          %s1890 = sshll.u32 %s1880, 4
          %s1891 = int_to_ptr.vmem [resolvable:$true] %s1890
          %1893 = dma.vmem_to_hbm [thread:$0]  %s1891, 128, %s1888, %s1877
        $region56: #{tpu_custom_call.1} parent=31 // pred_fallthru
          _
      $region32: #{tpu_custom_call.1} parent=5 // pred_fallthru
        _
      %p1894 = scmp.le.s32.totalorder 2, %s18
      // Predicated region
      $region57: #{tpu_custom_call.1} parent=5 // pred_check
        %p1895 = pneg %p1894
      $region58: #{tpu_custom_call.1} parent=5 // pred_check_branch
        %1897 = sbr.rel (%p1895) target = $region60
      $region59: #{tpu_custom_call.1} parent=5 // pred_region
        %s1898 = ssub.s32 %s18, 2
        // Predicated region
        $region61: #{tpu_custom_call.1} parent=59 // pred_check
          %p1899 = pneg %p155
        $region62: #{tpu_custom_call.1} parent=59 // pred_check_branch
          %1901 = sbr.rel (%p1899) target = $region64
        $region63: #{tpu_custom_call.1} parent=59 // pred_region
          %s1902 = sand.u32 %s140, 1
          %s1903 = scalar_lea.sflag [#allocation5], %s1902
          %s1904 = sand.u32 %s140, 1
          %s1905 = smul.addr %s1904, 8
          %s1906 = scalar_lea.vmem [#allocation9], %s1905
          %1907 = dma.done %s1903, 128
        $region64: #{tpu_custom_call.1} parent=59 // pred_fallthru
          _
      $region60: #{tpu_custom_call.1} parent=5 // pred_fallthru
        _
    $region6: #{tpu_custom_call.1} parent=1 // loop_footer
      %s22 = sadd.s32 1, %s18
    $region7: #{tpu_custom_call.1} parent=1 // loop_footer_branch
      %17 = sbr.rel target = $region3
    $region8: #{tpu_custom_call.1} parent=1 // loop_exit
      _
    %1908 = vsyncpa [#allocation4], 1
    %s1909 = scalar_lea.sflag [#allocation4], 1
    %1910 = vsyncpa %s1909, 1
    %1911 = vsyncpa [#allocation7], 1
    %s1912 = scalar_lea.sflag [#allocation7], 1
    %1913 = vsyncpa %s1912, 1
    %1914 = vsyncpa [#allocation5], 1
    %s1915 = scalar_lea.sflag [#allocation5], 1
    %1916 = vsyncpa %s1915, 1

</llo_original>
